<compile_context>
chip_gen: v7x
topology: tpu7x:2x2x1
jax: 0.10.0
libtpu: 0.0.40
codegen_flags: <defaults>
</compile_context>

<pallas_src>
import functools

import jax
import jax.numpy as jnp
from jax import lax
from jax.experimental import pallas as pl
from jax.experimental.pallas import tpu as pltpu


def _low_rank_rnn_kernel(u_ref, noise_ref, x0_ref, win_w_ref, win_b_ref,
                         n_ref, mt_ref, wout_w_ref, wout_b_ref,
                         out_ref, xfin_ref, traj_ref, x_scr,
                         *, noise_std, tau):
    """One (batch-block, time-block) grid step of the Low_Rank_RNN recurrence.

    Block shapes (B = batch block, T = time block):
      u_ref:     (B, T, in)   batch-major input block
      noise_ref: (T, B, hid)  time-major noise block
      x0_ref:    (B, hid)
      win_w_ref: (in, hid)    pre-scaled by tau
      win_b_ref: (1, hid)     pre-scaled by tau
      n_ref:     (hid, rank)
      mt_ref:    (rank, hid)  M.T pre-scaled by tau / hidden_dim (mode 'cont')
      wout_w_ref:(hid, out)   wout_b_ref: (1, out)
      out_ref:   (B, T, out)  traj_ref: (B, T, hid)  xfin_ref: (B, hid)
      x_scr:     (B, hid)     VMEM scratch carrying state across time blocks
    """
    B, T, in_dim = u_ref.shape
    hid = x0_ref.shape[1]
    rank = mt_ref.shape[0]
    out_dim = wout_w_ref.shape[1]

    # Initialize the carried state on the first time block of each batch block.
    @pl.when(pl.program_id(1) == 0)
    def _():
        x_scr[...] = x0_ref[...]

    # --- Hoisted, lane-dense input projection for the whole time block ------
    # One well-shaped MXU pass, off the serial dependency chain.
    u2 = u_ref[...].reshape(B * T, in_dim)
    inp = (jnp.dot(u2, win_w_ref[...], preferred_element_type=jnp.float32)
           + win_b_ref[...]).reshape(B, T, hid)

    n_mat = n_ref[...]          # (hid, rank)
    m_t = mt_ref[...]           # (rank, hid), already carries tau / hidden_dim
    one_m_tau = 1.0 - tau

    # --- Serial recurrence over the time block (statically unrolled) --------
    x = x_scr[...]              # state carried in values inside the block
    r = jnp.tanh(x)             # form == 'rate'
    xs = []
    rs = []
    for t in range(T):          # T is a small static block size (<= ~8)
        rn = jnp.dot(r, n_mat, preferred_element_type=jnp.float32)     # (B, rank)
        if rank <= 8:
            # Rank expansion on the VPU: a K=rank MXU pass is pure latency.
            hw = rn[:, 0:1] * m_t[0:1, :]
            for k in range(1, rank):
                hw = hw + rn[:, k:k + 1] * m_t[k:k + 1, :]
        else:
            hw = jnp.dot(rn, m_t, preferred_element_type=jnp.float32)  # (B, hid)
        # x <- (1-tau)*x + tau*(hidden_W + input_I) + noise_std*noise[t]
        # (tau and 1/hidden_dim are folded into m_t / win_w / win_b.)
        x = one_m_tau * x + (hw + inp[:, t, :]) + noise_std * noise_ref[t]
        r = jnp.tanh(x)         # single tanh per step; reused by the readout
        xs.append(x)
        rs.append(r)

    # Carry state to the next time block; final-state output (resident block).
    x_scr[...] = x
    xfin_ref[...] = x

    # --- One dense trajectory store + one hoisted readout matmul per block --
    traj_ref[...] = jnp.stack(xs, axis=1)                    # (B, T, hid)
    r2 = jnp.stack(rs, axis=1).reshape(B * T, hid)
    out2 = (jnp.dot(r2, wout_w_ref[...], preferred_element_type=jnp.float32)
            + wout_b_ref[...])
    out_ref[...] = out2.reshape(B, T, out_dim)


def low_rank_rnn_forward(u, x0, noise, params, *, noise_std=0.05, tau=0.2,
                         t_blk=8, b_blk=None):
    """u: (b, seq, in) batch-major (PyTorch convention); x0: (b, hid) or None;
    noise: (seq, b, hid) (matches torch.randn(seq, b, hid) in the module).
    Returns (output (b, seq, out), x_final (b, hid), trajectories (b, seq, hid)).

    t_blk: time-block size (must divide seq; keep it a multiple of 8 or equal
    to seq).  Size it against VMEM — halve it on v7x relative to v5e/v6e."""
    b, seq, in_dim = u.shape
    hid, rank = params["M"].shape
    out_dim = params["wout_w"].shape[1]
    if b_blk is None:
        b_blk = b
    assert seq % t_blk == 0 and b % b_blk == 0
    if x0 is None:
        x0 = jnp.zeros((b, hid), jnp.float32)

    # One-time tiny parameter transforms: fold tau (and 1/hidden_dim, mode
    # 'cont') into the weights so the per-step update is a pure FMA chain.
    f32 = jnp.float32
    win_w = (params["win_w"] * tau).astype(f32)
    win_b = (params["win_b"] * tau).astype(f32)
    m_t = (params["M"].T * (tau / hid)).astype(f32)
    n_mat = params["N"].astype(f32)
    wout_w = params["wout_w"].astype(f32)
    wout_b = params["wout_b"].astype(f32)

    kernel = functools.partial(_low_rank_rnn_kernel,
                               noise_std=noise_std, tau=tau)
    grid = (b // b_blk, seq // t_blk)     # (parallel batch, serial time)

    grid_spec = pltpu.PrefetchScalarGridSpec(
        num_scalar_prefetch=0,
        grid=grid,
        in_specs=[
            pl.BlockSpec((b_blk, t_blk, in_dim), lambda bi, ti: (bi, ti, 0)),  # u
            pl.BlockSpec((t_blk, b_blk, hid), lambda bi, ti: (ti, bi, 0)),     # noise
            pl.BlockSpec((b_blk, hid), lambda bi, ti: (bi, 0)),                # x0
            pl.BlockSpec((in_dim, hid), lambda bi, ti: (0, 0)),                # win_w (tau-scaled)
            pl.BlockSpec((1, hid), lambda bi, ti: (0, 0)),                     # win_b (tau-scaled)
            pl.BlockSpec((hid, rank), lambda bi, ti: (0, 0)),                  # N
            pl.BlockSpec((rank, hid), lambda bi, ti: (0, 0)),                  # M.T * tau/hid
            pl.BlockSpec((hid, out_dim), lambda bi, ti: (0, 0)),               # wout_w
            pl.BlockSpec((1, out_dim), lambda bi, ti: (0, 0)),                 # wout_b
        ],
        out_specs=[
            pl.BlockSpec((b_blk, t_blk, out_dim), lambda bi, ti: (bi, ti, 0)),  # output
            pl.BlockSpec((b_blk, hid), lambda bi, ti: (bi, 0)),                 # x_final
            pl.BlockSpec((b_blk, t_blk, hid), lambda bi, ti: (bi, ti, 0)),      # trajectories
        ],
        scratch_shapes=[pltpu.VMEM((b_blk, hid), jnp.float32)],
    )

    output, x_fin, traj = pl.pallas_call(
        kernel,
        out_shape=(
            jax.ShapeDtypeStruct((b, seq, out_dim), jnp.float32),
            jax.ShapeDtypeStruct((b, hid), jnp.float32),
            jax.ShapeDtypeStruct((b, seq, hid), jnp.float32),
        ),
        grid_spec=grid_spec,
        compiler_params=pltpu.CompilerParams(
            dimension_semantics=("parallel", "arbitrary")),
    )(u.astype(f32), noise.astype(f32), x0.astype(f32),
      win_w, win_b, n_mat, m_t, wout_w, wout_b)
    return output, x_fin, traj


def init_params(key, input_size, output_size, hidden_dim, rank):
    """Deterministic parameter init mirroring the module's __init__ shapes.
    w_in / w_out weights are stored transposed ((in, hid) / (hid, out)) so the
    kernel does x @ W + b."""
    k_m, k_n, k_wi, k_bi, k_wo, k_bo = jax.random.split(key, 6)
    xav_in = (6.0 / (input_size + hidden_dim)) ** 0.5
    xav_out = (6.0 / (hidden_dim + output_size)) ** 0.5
    return {
        "M": jax.random.normal(k_m, (hidden_dim, rank), jnp.float32),
        "N": jax.random.normal(k_n, (hidden_dim, rank), jnp.float32),
        "win_w": jax.random.uniform(k_wi, (input_size, hidden_dim), jnp.float32,
                                    -xav_in, xav_in),
        "win_b": jax.random.uniform(k_bi, (1, hidden_dim), jnp.float32,
                                    -1.0 / input_size ** 0.5, 1.0 / input_size ** 0.5),
        "wout_w": jax.random.uniform(k_wo, (hidden_dim, output_size), jnp.float32,
                                     -xav_out, xav_out),
        "wout_b": jax.random.uniform(k_bo, (1, output_size), jnp.float32,
                                     -1.0 / hidden_dim ** 0.5, 1.0 / hidden_dim ** 0.5),
    }


def reference_forward(u, x0, noise, params, *, noise_std=0.05, tau=0.2):
    """Pure-JAX reference of the PyTorch forward (rate / cont / tanh)."""
    b, seq, _ = u.shape
    hid = params["M"].shape[0]
    x = jnp.zeros((b, hid), jnp.float32) if x0 is None else x0
    trajs = []
    for t in range(seq):
        r = jnp.tanh(x)
        input_I = u[:, t, :] @ params["win_w"] + params["win_b"]
        hidden_W = r @ params["N"] @ params["M"].T / hid
        rec_x = hidden_W + input_I
        x = x + noise_std * noise[t] + tau * (-x + rec_x)
        trajs.append(x)
    traj = jnp.stack(trajs, axis=1)                        # (b, seq, hid)
    output = jnp.tanh(traj) @ params["wout_w"] + params["wout_b"]
    return output, x, traj


if __name__ == "__main__":
    batch, seq, input_size, output_size, hidden_dim, rank = 2, 16, 4, 3, 32, 2

    key = jax.random.PRNGKey(0)
    k_p, k_u, k_x0, k_n = jax.random.split(key, 4)
    params = init_params(k_p, input_size, output_size, hidden_dim, rank)

    u = jax.random.normal(k_u, (batch, seq, input_size), jnp.float32)
    x0 = jax.random.normal(k_x0, (batch, hidden_dim), jnp.float32)
    # torch.randn(seq, b, hid) is drawn inside the module's forward; generated
    # here deterministically and passed into the kernel as an explicit input.
    noise = jax.random.normal(k_n, (seq, batch, hidden_dim), jnp.float32)

    # seq=16, t_blk=8 -> 2 time blocks: exercises state carry across the grid.
    out, x_fin, traj = low_rank_rnn_forward(u, x0, noise, params, t_blk=8)
    jax.block_until_ready((out, x_fin, traj))

    out_r, x_r, traj_r = reference_forward(u, x0, noise, params)
    assert out.shape == (batch, seq, output_size)
    assert x_fin.shape == (batch, hidden_dim)
    assert traj.shape == (batch, seq, hidden_dim)
    assert jnp.allclose(out, out_r, atol=1e-4, rtol=1e-4)
    assert jnp.allclose(x_fin, x_r, atol=1e-4, rtol=1e-4)
    assert jnp.allclose(traj, traj_r, atol=1e-4, rtol=1e-4)

    print("KERNEL_OK")
</pallas_src>

<mosaic_0001>
module attributes {stable_mosaic.version = 11 : i64} {
  func.func @_low_rank_rnn_kernel(%arg0: i32, %arg1: i32, %arg2: memref<2x8x4xf32, #tpu.memory_space<vmem>>, %arg3: memref<8x2x32xf32, #tpu.memory_space<vmem>>, %arg4: memref<2x32xf32, #tpu.memory_space<vmem>>, %arg5: memref<4x32xf32, #tpu.memory_space<vmem>>, %arg6: memref<1x32xf32, #tpu.memory_space<vmem>>, %arg7: memref<32x2xf32, #tpu.memory_space<vmem>>, %arg8: memref<2x32xf32, #tpu.memory_space<vmem>>, %arg9: memref<32x3xf32, #tpu.memory_space<vmem>>, %arg10: memref<1x3xf32, #tpu.memory_space<vmem>>, %arg11: memref<2x8x3xf32, #tpu.memory_space<vmem>>, %arg12: memref<2x32xf32, #tpu.memory_space<vmem>>, %arg13: memref<2x8x32xf32, #tpu.memory_space<vmem>>, %arg14: memref<2x32xf32, #tpu.memory_space<vmem>>) attributes {dimension_semantics = [#tpu.dimension_semantics<parallel>, #tpu.dimension_semantics<arbitrary>], iteration_bounds = array<i64: 1, 2>, scalar_prefetch = 0 : i64, scratch_operands = 1 : i64, tpu.core_type = #tpu.core_type<tc>, window_params = [{transform_indices = @transform_0, window_bounds = array<i64: 2, 8, 4>}, {transform_indices = @transform_1, window_bounds = array<i64: 8, 2, 32>}, {transform_indices = @transform_2, window_bounds = array<i64: 2, 32>}, {pipeline_mode = #tpu.pipeline_mode<synchronous>, transform_indices = @transform_3, window_bounds = array<i64: 4, 32>}, {pipeline_mode = #tpu.pipeline_mode<synchronous>, transform_indices = @transform_4, window_bounds = array<i64: 1, 32>}, {pipeline_mode = #tpu.pipeline_mode<synchronous>, transform_indices = @transform_5, window_bounds = array<i64: 32, 2>}, {pipeline_mode = #tpu.pipeline_mode<synchronous>, transform_indices = @transform_6, window_bounds = array<i64: 2, 32>}, {pipeline_mode = #tpu.pipeline_mode<synchronous>, transform_indices = @transform_7, window_bounds = array<i64: 32, 3>}, {pipeline_mode = #tpu.pipeline_mode<synchronous>, transform_indices = @transform_8, window_bounds = array<i64: 1, 3>}, {transform_indices = @transform_9, window_bounds = array<i64: 2, 8, 3>}, {transform_indices = @transform_10, window_bounds = array<i64: 2, 32>}, {transform_indices = @transform_11, window_bounds = array<i64: 2, 8, 32>}]} {
    %c0_i32 = arith.constant 0 : i32
    %0 = arith.cmpi eq, %arg1, %c0_i32 : i32
    %1 = arith.extui %0 : i1 to i32
    %c0_i32_0 = arith.constant 0 : i32
    %2 = arith.cmpi ne, %1, %c0_i32_0 : i32
    scf.if %2 {
      %c0_69 = arith.constant 0 : index
      %c0_70 = arith.constant 0 : index
      %236 = vector.load %arg4[%c0_69, %c0_70] : memref<2x32xf32, #tpu.memory_space<vmem>>, vector<2x32xf32>
      %c0_71 = arith.constant 0 : index
      %c0_72 = arith.constant 0 : index
      %237 = vector.load %arg14[%c0_71, %c0_72] : memref<2x32xf32, #tpu.memory_space<vmem>>, vector<2x32xf32>
      tpu.vector_store %arg14[%c0_71, %c0_72], %236 {strides = array<i32>} : memref<2x32xf32, #tpu.memory_space<vmem>>, vector<2x32xf32>,
    } else {
    }
    %c0 = arith.constant 0 : index
    %c0_1 = arith.constant 0 : index
    %c0_2 = arith.constant 0 : index
    %3 = vector.load %arg2[%c0, %c0_1, %c0_2] : memref<2x8x4xf32, #tpu.memory_space<vmem>>, vector<2x8x4xf32>
    %4 = vector.shape_cast %3 : vector<2x8x4xf32> to vector<16x4xf32>
    %c0_3 = arith.constant 0 : index
    %c0_4 = arith.constant 0 : index
    %5 = vector.load %arg5[%c0_3, %c0_4] : memref<4x32xf32, #tpu.memory_space<vmem>>, vector<4x32xf32>
    %cst = arith.constant dense<0.000000e+00> : vector<16x32xf32>
    %6 = tpu.matmul %4, %5, %cst {dimension_numbers = #tpu.dot_dimension_numbers<[1], [0], [0], [1], [0, 0, 1, 1], [], []>} : vector<16x4xf32>, vector<4x32xf32>, vector<16x32xf32> -> vector<16x32xf32>
    %c0_5 = arith.constant 0 : index
    %c0_6 = arith.constant 0 : index
    %7 = vector.load %arg6[%c0_5, %c0_6] : memref<1x32xf32, #tpu.memory_space<vmem>>, vector<1x32xf32>
    %8 = vector.broadcast %7 : vector<1x32xf32> to vector<16x32xf32>
    %9 = arith.addf %6, %8 : vector<16x32xf32>
    %10 = vector.shape_cast %9 : vector<16x32xf32> to vector<2x8x32xf32>
    %c0_7 = arith.constant 0 : index
    %c0_8 = arith.constant 0 : index
    %11 = vector.load %arg7[%c0_7, %c0_8] : memref<32x2xf32, #tpu.memory_space<vmem>>, vector<32x2xf32>
    %c0_9 = arith.constant 0 : index
    %c0_10 = arith.constant 0 : index
    %12 = vector.load %arg8[%c0_9, %c0_10] : memref<2x32xf32, #tpu.memory_space<vmem>>, vector<2x32xf32>
    %c0_11 = arith.constant 0 : index
    %c0_12 = arith.constant 0 : index
    %13 = vector.load %arg14[%c0_11, %c0_12] : memref<2x32xf32, #tpu.memory_space<vmem>>, vector<2x32xf32>
    %14 = math.tanh %13 : vector<2x32xf32>
    %cst_13 = arith.constant dense<0.000000e+00> : vector<2x2xf32>
    %15 = tpu.matmul %14, %11, %cst_13 {dimension_numbers = #tpu.dot_dimension_numbers<[1], [0], [0], [1], [0, 0, 1, 1], [], []>} : vector<2x32xf32>, vector<32x2xf32>, vector<2x2xf32> -> vector<2x2xf32>
    %16 = vector.extract_strided_slice %15 {offsets = [0, 0], sizes = [2, 1], strides = [1, 1]} : vector<2x2xf32> to vector<2x1xf32>
    %17 = vector.extract_strided_slice %12 {offsets = [0, 0], sizes = [1, 32], strides = [1, 1]} : vector<2x32xf32> to vector<1x32xf32>
    %18 = vector.broadcast %16 : vector<2x1xf32> to vector<2x32xf32>
    %19 = vector.broadcast %17 : vector<1x32xf32> to vector<2x32xf32>
    %20 = arith.mulf %18, %19 : vector<2x32xf32>
    %21 = vector.extract_strided_slice %15 {offsets = [0, 1], sizes = [2, 1], strides = [1, 1]} : vector<2x2xf32> to vector<2x1xf32>
    %22 = vector.extract_strided_slice %12 {offsets = [1, 0], sizes = [1, 32], strides = [1, 1]} : vector<2x32xf32> to vector<1x32xf32>
    %23 = vector.broadcast %21 : vector<2x1xf32> to vector<2x32xf32>
    %24 = vector.broadcast %22 : vector<1x32xf32> to vector<2x32xf32>
    %25 = arith.mulf %23, %24 : vector<2x32xf32>
    %26 = arith.addf %20, %25 : vector<2x32xf32>
    %cst_14 = arith.constant 8.000000e-01 : f32
    %27 = vector.broadcast %cst_14 : f32 to vector<2x32xf32>
    %28 = arith.mulf %27, %13 : vector<2x32xf32>
    %29 = vector.extract_strided_slice %10 {offsets = [0, 0, 0], sizes = [2, 1, 32], strides = [1, 1, 1]} : vector<2x8x32xf32> to vector<2x1x32xf32>
    %30 = vector.shape_cast %29 : vector<2x1x32xf32> to vector<2x32xf32>
    %31 = arith.addf %26, %30 : vector<2x32xf32>
    %32 = arith.addf %28, %31 : vector<2x32xf32>
    %c0_15 = arith.constant 0 : index
    %c0_16 = arith.constant 0 : index
    %c0_17 = arith.constant 0 : index
    %33 = vector.load %arg3[%c0_15, %c0_16, %c0_17] : memref<8x2x32xf32, #tpu.memory_space<vmem>>, vector<1x2x32xf32>
    %34 = vector.shape_cast %33 : vector<1x2x32xf32> to vector<2x32xf32>
    %cst_18 = arith.constant 5.000000e-02 : f32
    %35 = vector.broadcast %cst_18 : f32 to vector<2x32xf32>
    %36 = arith.mulf %35, %34 : vector<2x32xf32>
    %37 = arith.addf %32, %36 : vector<2x32xf32>
    %38 = math.tanh %37 : vector<2x32xf32>
    %cst_19 = arith.constant dense<0.000000e+00> : vector<2x2xf32>
    %39 = tpu.matmul %38, %11, %cst_19 {dimension_numbers = #tpu.dot_dimension_numbers<[1], [0], [0], [1], [0, 0, 1, 1], [], []>} : vector<2x32xf32>, vector<32x2xf32>, vector<2x2xf32> -> vector<2x2xf32>
    %40 = vector.extract_strided_slice %39 {offsets = [0, 0], sizes = [2, 1], strides = [1, 1]} : vector<2x2xf32> to vector<2x1xf32>
    %41 = vector.extract_strided_slice %12 {offsets = [0, 0], sizes = [1, 32], strides = [1, 1]} : vector<2x32xf32> to vector<1x32xf32>
    %42 = vector.broadcast %40 : vector<2x1xf32> to vector<2x32xf32>
    %43 = vector.broadcast %41 : vector<1x32xf32> to vector<2x32xf32>
    %44 = arith.mulf %42, %43 : vector<2x32xf32>
    %45 = vector.extract_strided_slice %39 {offsets = [0, 1], sizes = [2, 1], strides = [1, 1]} : vector<2x2xf32> to vector<2x1xf32>
    %46 = vector.extract_strided_slice %12 {offsets = [1, 0], sizes = [1, 32], strides = [1, 1]} : vector<2x32xf32> to vector<1x32xf32>
    %47 = vector.broadcast %45 : vector<2x1xf32> to vector<2x32xf32>
    %48 = vector.broadcast %46 : vector<1x32xf32> to vector<2x32xf32>
    %49 = arith.mulf %47, %48 : vector<2x32xf32>
    %50 = arith.addf %44, %49 : vector<2x32xf32>
    %cst_20 = arith.constant 8.000000e-01 : f32
    %51 = vector.broadcast %cst_20 : f32 to vector<2x32xf32>
    %52 = arith.mulf %51, %37 : vector<2x32xf32>
    %53 = vector.extract_strided_slice %10 {offsets = [0, 1, 0], sizes = [2, 1, 32], strides = [1, 1, 1]} : vector<2x8x32xf32> to vector<2x1x32xf32>
    %54 = vector.shape_cast %53 : vector<2x1x32xf32> to vector<2x32xf32>
    %55 = arith.addf %50, %54 : vector<2x32xf32>
    %56 = arith.addf %52, %55 : vector<2x32xf32>
    %c1 = arith.constant 1 : index
    %c0_21 = arith.constant 0 : index
    %c0_22 = arith.constant 0 : index
    %57 = vector.load %arg3[%c1, %c0_21, %c0_22] : memref<8x2x32xf32, #tpu.memory_space<vmem>>, vector<1x2x32xf32>
    %58 = vector.shape_cast %57 : vector<1x2x32xf32> to vector<2x32xf32>
    %cst_23 = arith.constant 5.000000e-02 : f32
    %59 = vector.broadcast %cst_23 : f32 to vector<2x32xf32>
    %60 = arith.mulf %59, %58 : vector<2x32xf32>
    %61 = arith.addf %56, %60 : vector<2x32xf32>
    %62 = math.tanh %61 : vector<2x32xf32>
    %cst_24 = arith.constant dense<0.000000e+00> : vector<2x2xf32>
    %63 = tpu.matmul %62, %11, %cst_24 {dimension_numbers = #tpu.dot_dimension_numbers<[1], [0], [0], [1], [0, 0, 1, 1], [], []>} : vector<2x32xf32>, vector<32x2xf32>, vector<2x2xf32> -> vector<2x2xf32>
    %64 = vector.extract_strided_slice %63 {offsets = [0, 0], sizes = [2, 1], strides = [1, 1]} : vector<2x2xf32> to vector<2x1xf32>
    %65 = vector.extract_strided_slice %12 {offsets = [0, 0], sizes = [1, 32], strides = [1, 1]} : vector<2x32xf32> to vector<1x32xf32>
    %66 = vector.broadcast %64 : vector<2x1xf32> to vector<2x32xf32>
    %67 = vector.broadcast %65 : vector<1x32xf32> to vector<2x32xf32>
    %68 = arith.mulf %66, %67 : vector<2x32xf32>
    %69 = vector.extract_strided_slice %63 {offsets = [0, 1], sizes = [2, 1], strides = [1, 1]} : vector<2x2xf32> to vector<2x1xf32>
    %70 = vector.extract_strided_slice %12 {offsets = [1, 0], sizes = [1, 32], strides = [1, 1]} : vector<2x32xf32> to vector<1x32xf32>
    %71 = vector.broadcast %69 : vector<2x1xf32> to vector<2x32xf32>
    %72 = vector.broadcast %70 : vector<1x32xf32> to vector<2x32xf32>
    %73 = arith.mulf %71, %72 : vector<2x32xf32>
    %74 = arith.addf %68, %73 : vector<2x32xf32>
    %cst_25 = arith.constant 8.000000e-01 : f32
    %75 = vector.broadcast %cst_25 : f32 to vector<2x32xf32>
    %76 = arith.mulf %75, %61 : vector<2x32xf32>
    %77 = vector.extract_strided_slice %10 {offsets = [0, 2, 0], sizes = [2, 1, 32], strides = [1, 1, 1]} : vector<2x8x32xf32> to vector<2x1x32xf32>
    %78 = vector.shape_cast %77 : vector<2x1x32xf32> to vector<2x32xf32>
    %79 = arith.addf %74, %78 : vector<2x32xf32>
    %80 = arith.addf %76, %79 : vector<2x32xf32>
    %c2 = arith.constant 2 : index
    %c0_26 = arith.constant 0 : index
    %c0_27 = arith.constant 0 : index
    %81 = vector.load %arg3[%c2, %c0_26, %c0_27] : memref<8x2x32xf32, #tpu.memory_space<vmem>>, vector<1x2x32xf32>
    %82 = vector.shape_cast %81 : vector<1x2x32xf32> to vector<2x32xf32>
    %cst_28 = arith.constant 5.000000e-02 : f32
    %83 = vector.broadcast %cst_28 : f32 to vector<2x32xf32>
    %84 = arith.mulf %83, %82 : vector<2x32xf32>
    %85 = arith.addf %80, %84 : vector<2x32xf32>
    %86 = math.tanh %85 : vector<2x32xf32>
    %cst_29 = arith.constant dense<0.000000e+00> : vector<2x2xf32>
    %87 = tpu.matmul %86, %11, %cst_29 {dimension_numbers = #tpu.dot_dimension_numbers<[1], [0], [0], [1], [0, 0, 1, 1], [], []>} : vector<2x32xf32>, vector<32x2xf32>, vector<2x2xf32> -> vector<2x2xf32>
    %88 = vector.extract_strided_slice %87 {offsets = [0, 0], sizes = [2, 1], strides = [1, 1]} : vector<2x2xf32> to vector<2x1xf32>
    %89 = vector.extract_strided_slice %12 {offsets = [0, 0], sizes = [1, 32], strides = [1, 1]} : vector<2x32xf32> to vector<1x32xf32>
    %90 = vector.broadcast %88 : vector<2x1xf32> to vector<2x32xf32>
    %91 = vector.broadcast %89 : vector<1x32xf32> to vector<2x32xf32>
    %92 = arith.mulf %90, %91 : vector<2x32xf32>
    %93 = vector.extract_strided_slice %87 {offsets = [0, 1], sizes = [2, 1], strides = [1, 1]} : vector<2x2xf32> to vector<2x1xf32>
    %94 = vector.extract_strided_slice %12 {offsets = [1, 0], sizes = [1, 32], strides = [1, 1]} : vector<2x32xf32> to vector<1x32xf32>
    %95 = vector.broadcast %93 : vector<2x1xf32> to vector<2x32xf32>
    %96 = vector.broadcast %94 : vector<1x32xf32> to vector<2x32xf32>
    %97 = arith.mulf %95, %96 : vector<2x32xf32>
    %98 = arith.addf %92, %97 : vector<2x32xf32>
    %cst_30 = arith.constant 8.000000e-01 : f32
    %99 = vector.broadcast %cst_30 : f32 to vector<2x32xf32>
    %100 = arith.mulf %99, %85 : vector<2x32xf32>
    %101 = vector.extract_strided_slice %10 {offsets = [0, 3, 0], sizes = [2, 1, 32], strides = [1, 1, 1]} : vector<2x8x32xf32> to vector<2x1x32xf32>
    %102 = vector.shape_cast %101 : vector<2x1x32xf32> to vector<2x32xf32>
    %103 = arith.addf %98, %102 : vector<2x32xf32>
    %104 = arith.addf %100, %103 : vector<2x32xf32>
    %c3 = arith.constant 3 : index
    %c0_31 = arith.constant 0 : index
    %c0_32 = arith.constant 0 : index
    %105 = vector.load %arg3[%c3, %c0_31, %c0_32] : memref<8x2x32xf32, #tpu.memory_space<vmem>>, vector<1x2x32xf32>
    %106 = vector.shape_cast %105 : vector<1x2x32xf32> to vector<2x32xf32>
    %cst_33 = arith.constant 5.000000e-02 : f32
    %107 = vector.broadcast %cst_33 : f32 to vector<2x32xf32>
    %108 = arith.mulf %107, %106 : vector<2x32xf32>
    %109 = arith.addf %104, %108 : vector<2x32xf32>
    %110 = math.tanh %109 : vector<2x32xf32>
    %cst_34 = arith.constant dense<0.000000e+00> : vector<2x2xf32>
    %111 = tpu.matmul %110, %11, %cst_34 {dimension_numbers = #tpu.dot_dimension_numbers<[1], [0], [0], [1], [0, 0, 1, 1], [], []>} : vector<2x32xf32>, vector<32x2xf32>, vector<2x2xf32> -> vector<2x2xf32>
    %112 = vector.extract_strided_slice %111 {offsets = [0, 0], sizes = [2, 1], strides = [1, 1]} : vector<2x2xf32> to vector<2x1xf32>
    %113 = vector.extract_strided_slice %12 {offsets = [0, 0], sizes = [1, 32], strides = [1, 1]} : vector<2x32xf32> to vector<1x32xf32>
    %114 = vector.broadcast %112 : vector<2x1xf32> to vector<2x32xf32>
    %115 = vector.broadcast %113 : vector<1x32xf32> to vector<2x32xf32>
    %116 = arith.mulf %114, %115 : vector<2x32xf32>
    %117 = vector.extract_strided_slice %111 {offsets = [0, 1], sizes = [2, 1], strides = [1, 1]} : vector<2x2xf32> to vector<2x1xf32>
    %118 = vector.extract_strided_slice %12 {offsets = [1, 0], sizes = [1, 32], strides = [1, 1]} : vector<2x32xf32> to vector<1x32xf32>
    %119 = vector.broadcast %117 : vector<2x1xf32> to vector<2x32xf32>
    %120 = vector.broadcast %118 : vector<1x32xf32> to vector<2x32xf32>
    %121 = arith.mulf %119, %120 : vector<2x32xf32>
    %122 = arith.addf %116, %121 : vector<2x32xf32>
    %cst_35 = arith.constant 8.000000e-01 : f32
    %123 = vector.broadcast %cst_35 : f32 to vector<2x32xf32>
    %124 = arith.mulf %123, %109 : vector<2x32xf32>
    %125 = vector.extract_strided_slice %10 {offsets = [0, 4, 0], sizes = [2, 1, 32], strides = [1, 1, 1]} : vector<2x8x32xf32> to vector<2x1x32xf32>
    %126 = vector.shape_cast %125 : vector<2x1x32xf32> to vector<2x32xf32>
    %127 = arith.addf %122, %126 : vector<2x32xf32>
    %128 = arith.addf %124, %127 : vector<2x32xf32>
    %c4 = arith.constant 4 : index
    %c0_36 = arith.constant 0 : index
    %c0_37 = arith.constant 0 : index
    %129 = vector.load %arg3[%c4, %c0_36, %c0_37] : memref<8x2x32xf32, #tpu.memory_space<vmem>>, vector<1x2x32xf32>
    %130 = vector.shape_cast %129 : vector<1x2x32xf32> to vector<2x32xf32>
    %cst_38 = arith.constant 5.000000e-02 : f32
    %131 = vector.broadcast %cst_38 : f32 to vector<2x32xf32>
    %132 = arith.mulf %131, %130 : vector<2x32xf32>
    %133 = arith.addf %128, %132 : vector<2x32xf32>
    %134 = math.tanh %133 : vector<2x32xf32>
    %cst_39 = arith.constant dense<0.000000e+00> : vector<2x2xf32>
    %135 = tpu.matmul %134, %11, %cst_39 {dimension_numbers = #tpu.dot_dimension_numbers<[1], [0], [0], [1], [0, 0, 1, 1], [], []>} : vector<2x32xf32>, vector<32x2xf32>, vector<2x2xf32> -> vector<2x2xf32>
    %136 = vector.extract_strided_slice %135 {offsets = [0, 0], sizes = [2, 1], strides = [1, 1]} : vector<2x2xf32> to vector<2x1xf32>
    %137 = vector.extract_strided_slice %12 {offsets = [0, 0], sizes = [1, 32], strides = [1, 1]} : vector<2x32xf32> to vector<1x32xf32>
    %138 = vector.broadcast %136 : vector<2x1xf32> to vector<2x32xf32>
    %139 = vector.broadcast %137 : vector<1x32xf32> to vector<2x32xf32>
    %140 = arith.mulf %138, %139 : vector<2x32xf32>
    %141 = vector.extract_strided_slice %135 {offsets = [0, 1], sizes = [2, 1], strides = [1, 1]} : vector<2x2xf32> to vector<2x1xf32>
    %142 = vector.extract_strided_slice %12 {offsets = [1, 0], sizes = [1, 32], strides = [1, 1]} : vector<2x32xf32> to vector<1x32xf32>
    %143 = vector.broadcast %141 : vector<2x1xf32> to vector<2x32xf32>
    %144 = vector.broadcast %142 : vector<1x32xf32> to vector<2x32xf32>
    %145 = arith.mulf %143, %144 : vector<2x32xf32>
    %146 = arith.addf %140, %145 : vector<2x32xf32>
    %cst_40 = arith.constant 8.000000e-01 : f32
    %147 = vector.broadcast %cst_40 : f32 to vector<2x32xf32>
    %148 = arith.mulf %147, %133 : vector<2x32xf32>
    %149 = vector.extract_strided_slice %10 {offsets = [0, 5, 0], sizes = [2, 1, 32], strides = [1, 1, 1]} : vector<2x8x32xf32> to vector<2x1x32xf32>
    %150 = vector.shape_cast %149 : vector<2x1x32xf32> to vector<2x32xf32>
    %151 = arith.addf %146, %150 : vector<2x32xf32>
    %152 = arith.addf %148, %151 : vector<2x32xf32>
    %c5 = arith.constant 5 : index
    %c0_41 = arith.constant 0 : index
    %c0_42 = arith.constant 0 : index
    %153 = vector.load %arg3[%c5, %c0_41, %c0_42] : memref<8x2x32xf32, #tpu.memory_space<vmem>>, vector<1x2x32xf32>
    %154 = vector.shape_cast %153 : vector<1x2x32xf32> to vector<2x32xf32>
    %cst_43 = arith.constant 5.000000e-02 : f32
    %155 = vector.broadcast %cst_43 : f32 to vector<2x32xf32>
    %156 = arith.mulf %155, %154 : vector<2x32xf32>
    %157 = arith.addf %152, %156 : vector<2x32xf32>
    %158 = math.tanh %157 : vector<2x32xf32>
    %cst_44 = arith.constant dense<0.000000e+00> : vector<2x2xf32>
    %159 = tpu.matmul %158, %11, %cst_44 {dimension_numbers = #tpu.dot_dimension_numbers<[1], [0], [0], [1], [0, 0, 1, 1], [], []>} : vector<2x32xf32>, vector<32x2xf32>, vector<2x2xf32> -> vector<2x2xf32>
    %160 = vector.extract_strided_slice %159 {offsets = [0, 0], sizes = [2, 1], strides = [1, 1]} : vector<2x2xf32> to vector<2x1xf32>
    %161 = vector.extract_strided_slice %12 {offsets = [0, 0], sizes = [1, 32], strides = [1, 1]} : vector<2x32xf32> to vector<1x32xf32>
    %162 = vector.broadcast %160 : vector<2x1xf32> to vector<2x32xf32>
    %163 = vector.broadcast %161 : vector<1x32xf32> to vector<2x32xf32>
    %164 = arith.mulf %162, %163 : vector<2x32xf32>
    %165 = vector.extract_strided_slice %159 {offsets = [0, 1], sizes = [2, 1], strides = [1, 1]} : vector<2x2xf32> to vector<2x1xf32>
    %166 = vector.extract_strided_slice %12 {offsets = [1, 0], sizes = [1, 32], strides = [1, 1]} : vector<2x32xf32> to vector<1x32xf32>
    %167 = vector.broadcast %165 : vector<2x1xf32> to vector<2x32xf32>
    %168 = vector.broadcast %166 : vector<1x32xf32> to vector<2x32xf32>
    %169 = arith.mulf %167, %168 : vector<2x32xf32>
    %170 = arith.addf %164, %169 : vector<2x32xf32>
    %cst_45 = arith.constant 8.000000e-01 : f32
    %171 = vector.broadcast %cst_45 : f32 to vector<2x32xf32>
    %172 = arith.mulf %171, %157 : vector<2x32xf32>
    %173 = vector.extract_strided_slice %10 {offsets = [0, 6, 0], sizes = [2, 1, 32], strides = [1, 1, 1]} : vector<2x8x32xf32> to vector<2x1x32xf32>
    %174 = vector.shape_cast %173 : vector<2x1x32xf32> to vector<2x32xf32>
    %175 = arith.addf %170, %174 : vector<2x32xf32>
    %176 = arith.addf %172, %175 : vector<2x32xf32>
    %c6 = arith.constant 6 : index
    %c0_46 = arith.constant 0 : index
    %c0_47 = arith.constant 0 : index
    %177 = vector.load %arg3[%c6, %c0_46, %c0_47] : memref<8x2x32xf32, #tpu.memory_space<vmem>>, vector<1x2x32xf32>
    %178 = vector.shape_cast %177 : vector<1x2x32xf32> to vector<2x32xf32>
    %cst_48 = arith.constant 5.000000e-02 : f32
    %179 = vector.broadcast %cst_48 : f32 to vector<2x32xf32>
    %180 = arith.mulf %179, %178 : vector<2x32xf32>
    %181 = arith.addf %176, %180 : vector<2x32xf32>
    %182 = math.tanh %181 : vector<2x32xf32>
    %cst_49 = arith.constant dense<0.000000e+00> : vector<2x2xf32>
    %183 = tpu.matmul %182, %11, %cst_49 {dimension_numbers = #tpu.dot_dimension_numbers<[1], [0], [0], [1], [0, 0, 1, 1], [], []>} : vector<2x32xf32>, vector<32x2xf32>, vector<2x2xf32> -> vector<2x2xf32>
    %184 = vector.extract_strided_slice %183 {offsets = [0, 0], sizes = [2, 1], strides = [1, 1]} : vector<2x2xf32> to vector<2x1xf32>
    %185 = vector.extract_strided_slice %12 {offsets = [0, 0], sizes = [1, 32], strides = [1, 1]} : vector<2x32xf32> to vector<1x32xf32>
    %186 = vector.broadcast %184 : vector<2x1xf32> to vector<2x32xf32>
    %187 = vector.broadcast %185 : vector<1x32xf32> to vector<2x32xf32>
    %188 = arith.mulf %186, %187 : vector<2x32xf32>
    %189 = vector.extract_strided_slice %183 {offsets = [0, 1], sizes = [2, 1], strides = [1, 1]} : vector<2x2xf32> to vector<2x1xf32>
    %190 = vector.extract_strided_slice %12 {offsets = [1, 0], sizes = [1, 32], strides = [1, 1]} : vector<2x32xf32> to vector<1x32xf32>
    %191 = vector.broadcast %189 : vector<2x1xf32> to vector<2x32xf32>
    %192 = vector.broadcast %190 : vector<1x32xf32> to vector<2x32xf32>
    %193 = arith.mulf %191, %192 : vector<2x32xf32>
    %194 = arith.addf %188, %193 : vector<2x32xf32>
    %cst_50 = arith.constant 8.000000e-01 : f32
    %195 = vector.broadcast %cst_50 : f32 to vector<2x32xf32>
    %196 = arith.mulf %195, %181 : vector<2x32xf32>
    %197 = vector.extract_strided_slice %10 {offsets = [0, 7, 0], sizes = [2, 1, 32], strides = [1, 1, 1]} : vector<2x8x32xf32> to vector<2x1x32xf32>
    %198 = vector.shape_cast %197 : vector<2x1x32xf32> to vector<2x32xf32>
    %199 = arith.addf %194, %198 : vector<2x32xf32>
    %200 = arith.addf %196, %199 : vector<2x32xf32>
    %c7 = arith.constant 7 : index
    %c0_51 = arith.constant 0 : index
    %c0_52 = arith.constant 0 : index
    %201 = vector.load %arg3[%c7, %c0_51, %c0_52] : memref<8x2x32xf32, #tpu.memory_space<vmem>>, vector<1x2x32xf32>
    %202 = vector.shape_cast %201 : vector<1x2x32xf32> to vector<2x32xf32>
    %cst_53 = arith.constant 5.000000e-02 : f32
    %203 = vector.broadcast %cst_53 : f32 to vector<2x32xf32>
    %204 = arith.mulf %203, %202 : vector<2x32xf32>
    %205 = arith.addf %200, %204 : vector<2x32xf32>
    %206 = math.tanh %205 : vector<2x32xf32>
    %c0_54 = arith.constant 0 : index
    %c0_55 = arith.constant 0 : index
    %207 = vector.load %arg14[%c0_54, %c0_55] : memref<2x32xf32, #tpu.memory_space<vmem>>, vector<2x32xf32>
    tpu.vector_store %arg14[%c0_54, %c0_55], %205 {strides = array<i32>} : memref<2x32xf32, #tpu.memory_space<vmem>>, vector<2x32xf32>,
    %c0_56 = arith.constant 0 : index
    %c0_57 = arith.constant 0 : index
    %208 = vector.load %arg12[%c0_56, %c0_57] : memref<2x32xf32, #tpu.memory_space<vmem>>, vector<2x32xf32>
    tpu.vector_store %arg12[%c0_56, %c0_57], %205 {strides = array<i32>} : memref<2x32xf32, #tpu.memory_space<vmem>>, vector<2x32xf32>,
    %209 = vector.shape_cast %37 : vector<2x32xf32> to vector<2x1x32xf32>
    %210 = vector.shape_cast %61 : vector<2x32xf32> to vector<2x1x32xf32>
    %211 = vector.shape_cast %85 : vector<2x32xf32> to vector<2x1x32xf32>
    %212 = vector.shape_cast %109 : vector<2x32xf32> to vector<2x1x32xf32>
    %213 = vector.shape_cast %133 : vector<2x32xf32> to vector<2x1x32xf32>
    %214 = vector.shape_cast %157 : vector<2x32xf32> to vector<2x1x32xf32>
    %215 = vector.shape_cast %181 : vector<2x32xf32> to vector<2x1x32xf32>
    %216 = vector.shape_cast %205 : vector<2x32xf32> to vector<2x1x32xf32>
    %217 = tpu.concatenate %209, %210, %211, %212, %213, %214, %215, %216 in 1 : vector<2x1x32xf32>, vector<2x1x32xf32>, vector<2x1x32xf32>, vector<2x1x32xf32>, vector<2x1x32xf32>, vector<2x1x32xf32>, vector<2x1x32xf32>, vector<2x1x32xf32> -> vector<2x8x32xf32>
    %c0_58 = arith.constant 0 : index
    %c0_59 = arith.constant 0 : index
    %c0_60 = arith.constant 0 : index
    %218 = vector.load %arg13[%c0_58, %c0_59, %c0_60] : memref<2x8x32xf32, #tpu.memory_space<vmem>>, vector<2x8x32xf32>
    tpu.vector_store %arg13[%c0_58, %c0_59, %c0_60], %217 {strides = array<i32>} : memref<2x8x32xf32, #tpu.memory_space<vmem>>, vector<2x8x32xf32>,
    %219 = vector.shape_cast %38 : vector<2x32xf32> to vector<2x1x32xf32>
    %220 = vector.shape_cast %62 : vector<2x32xf32> to vector<2x1x32xf32>
    %221 = vector.shape_cast %86 : vector<2x32xf32> to vector<2x1x32xf32>
    %222 = vector.shape_cast %110 : vector<2x32xf32> to vector<2x1x32xf32>
    %223 = vector.shape_cast %134 : vector<2x32xf32> to vector<2x1x32xf32>
    %224 = vector.shape_cast %158 : vector<2x32xf32> to vector<2x1x32xf32>
    %225 = vector.shape_cast %182 : vector<2x32xf32> to vector<2x1x32xf32>
    %226 = vector.shape_cast %206 : vector<2x32xf32> to vector<2x1x32xf32>
    %227 = tpu.concatenate %219, %220, %221, %222, %223, %224, %225, %226 in 1 : vector<2x1x32xf32>, vector<2x1x32xf32>, vector<2x1x32xf32>, vector<2x1x32xf32>, vector<2x1x32xf32>, vector<2x1x32xf32>, vector<2x1x32xf32>, vector<2x1x32xf32> -> vector<2x8x32xf32>
    %228 = vector.shape_cast %227 : vector<2x8x32xf32> to vector<16x32xf32>
    %c0_61 = arith.constant 0 : index
    %c0_62 = arith.constant 0 : index
    %229 = vector.load %arg9[%c0_61, %c0_62] : memref<32x3xf32, #tpu.memory_space<vmem>>, vector<32x3xf32>
    %cst_63 = arith.constant dense<0.000000e+00> : vector<16x3xf32>
    %230 = tpu.matmul %228, %229, %cst_63 {dimension_numbers = #tpu.dot_dimension_numbers<[1], [0], [0], [1], [0, 0, 1, 1], [], []>} : vector<16x32xf32>, vector<32x3xf32>, vector<16x3xf32> -> vector<16x3xf32>
    %c0_64 = arith.constant 0 : index
    %c0_65 = arith.constant 0 : index
    %231 = vector.load %arg10[%c0_64, %c0_65] : memref<1x3xf32, #tpu.memory_space<vmem>>, vector<1x3xf32>
    %232 = vector.broadcast %231 : vector<1x3xf32> to vector<16x3xf32>
    %233 = arith.addf %230, %232 : vector<16x3xf32>
    %234 = vector.shape_cast %233 : vector<16x3xf32> to vector<2x8x3xf32>
    %c0_66 = arith.constant 0 : index
    %c0_67 = arith.constant 0 : index
    %c0_68 = arith.constant 0 : index
    %235 = vector.load %arg11[%c0_66, %c0_67, %c0_68] : memref<2x8x3xf32, #tpu.memory_space<vmem>>, vector<2x8x3xf32>
    tpu.vector_store %arg11[%c0_66, %c0_67, %c0_68], %234 {strides = array<i32>} : memref<2x8x3xf32, #tpu.memory_space<vmem>>, vector<2x8x3xf32>,
    return
  }
  func.func @transform_0(%arg0: i32, %arg1: i32) -> (i32, i32, i32) {
    %c0_i32 = arith.constant 0 : i32
    %c0_i32_0 = arith.constant 0 : i32
    return %arg0, %arg1, %c0_i32 : i32, i32, i32
  }
  func.func @transform_1(%arg0: i32, %arg1: i32) -> (i32, i32, i32) {
    %c0_i32 = arith.constant 0 : i32
    %c0_i32_0 = arith.constant 0 : i32
    return %arg1, %arg0, %c0_i32 : i32, i32, i32
  }
  func.func @transform_2(%arg0: i32, %arg1: i32) -> (i32, i32) {
    %c0_i32 = arith.constant 0 : i32
    %c0_i32_0 = arith.constant 0 : i32
    return %arg0, %c0_i32 : i32, i32
  }
  func.func @transform_3(%arg0: i32, %arg1: i32) -> (i32, i32) {
    %c0_i32 = arith.constant 0 : i32
    %c0_i32_0 = arith.constant 0 : i32
    %c0_i32_1 = arith.constant 0 : i32
    return %c0_i32, %c0_i32_0 : i32, i32
  }
  func.func @transform_4(%arg0: i32, %arg1: i32) -> (i32, i32) {
    %c0_i32 = arith.constant 0 : i32
    %c0_i32_0 = arith.constant 0 : i32
    %c0_i32_1 = arith.constant 0 : i32
    return %c0_i32, %c0_i32_0 : i32, i32
  }
  func.func @transform_5(%arg0: i32, %arg1: i32) -> (i32, i32) {
    %c0_i32 = arith.constant 0 : i32
    %c0_i32_0 = arith.constant 0 : i32
    %c0_i32_1 = arith.constant 0 : i32
    return %c0_i32, %c0_i32_0 : i32, i32
  }
  func.func @transform_6(%arg0: i32, %arg1: i32) -> (i32, i32) {
    %c0_i32 = arith.constant 0 : i32
    %c0_i32_0 = arith.constant 0 : i32
    %c0_i32_1 = arith.constant 0 : i32
    return %c0_i32, %c0_i32_0 : i32, i32
  }
  func.func @transform_7(%arg0: i32, %arg1: i32) -> (i32, i32) {
    %c0_i32 = arith.constant 0 : i32
    %c0_i32_0 = arith.constant 0 : i32
    %c0_i32_1 = arith.constant 0 : i32
    return %c0_i32, %c0_i32_0 : i32, i32
  }
  func.func @transform_8(%arg0: i32, %arg1: i32) -> (i32, i32) {
    %c0_i32 = arith.constant 0 : i32
    %c0_i32_0 = arith.constant 0 : i32
    %c0_i32_1 = arith.constant 0 : i32
    return %c0_i32, %c0_i32_0 : i32, i32
  }
  func.func @transform_9(%arg0: i32, %arg1: i32) -> (i32, i32, i32) {
    %c0_i32 = arith.constant 0 : i32
    %c0_i32_0 = arith.constant 0 : i32
    return %arg0, %arg1, %c0_i32 : i32, i32, i32
  }
  func.func @transform_10(%arg0: i32, %arg1: i32) -> (i32, i32) {
    %c0_i32 = arith.constant 0 : i32
    %c0_i32_0 = arith.constant 0 : i32
    return %arg0, %c0_i32 : i32, i32
  }
  func.func @transform_11(%arg0: i32, %arg1: i32) -> (i32, i32, i32) {
    %c0_i32 = arith.constant 0 : i32
    %c0_i32_0 = arith.constant 0 : i32
    return %arg0, %arg1, %c0_i32 : i32, i32, i32
  }
}

</mosaic_0001>

<llo_original>
// kernel: tpu_custom_call.1
$region0: #{tpu_custom_call.1}
  #allocation0 [shape = 'u32[]', space=smem, size = 0x4, offset = 0x4, fixed_abs, tag = 'smem constant byte address 0x4 - core index']
  #allocation1 [shape = 'u32[144,128]{1,0:T(1,128)}', space=vmem, size = 0x12000, scoped, tag = 'internal scratch']
  #allocation2 [shape = 'f32[2,32]{1,0:T(2,128)}', space=vmem, size = 0x400, scoped, tag = 'scratch operand']
  %s0 = inlined_call_operand.vmem [shape: f32[2,16,4], index: 0, kind: input, shape index: {}]
  %s1 = inlined_call_operand.vmem [shape: f32[16,2,32], index: 1, kind: input, shape index: {}]
  %s2 = inlined_call_operand.vmem [shape: f32[2,32], index: 2, kind: input, shape index: {}]
  %s3 = inlined_call_operand.vmem [shape: f32[4,32], index: 3, kind: input, shape index: {}]
  %s4 = inlined_call_operand.vmem [shape: f32[1,32], index: 4, kind: input, shape index: {}]
  %s5 = inlined_call_operand.vmem [shape: f32[32,2], index: 5, kind: input, shape index: {}]
  %s6 = inlined_call_operand.vmem [shape: f32[2,32], index: 6, kind: input, shape index: {}]
  %s7 = inlined_call_operand.vmem [shape: f32[32,3], index: 7, kind: input, shape index: {}]
  %s8 = inlined_call_operand.vmem [shape: f32[1,3], index: 8, kind: input, shape index: {}]
  %s9 = inlined_call_operand.vmem [shape: f32[2,16,3], index: 9, kind: output, shape index: {0}]
  %s10 = inlined_call_operand.hbm [shape: f32[2,32], index: 10, kind: output, shape index: {1}]
  %s11 = inlined_call_operand.hbm [shape: f32[2,16,32], index: 11, kind: output, shape index: {2}]
  %12 = xla_tuple %s9, %s10, %s11
  %s13 = sld [smem:[#allocation0]]
  $region161: #{tpu_custom_call.1} parent=0
    _
  %s15 = ssub.s32 1, %s13
  %s16 = scalar_select 0, %s15, %s13
  $region1: #{tpu_custom_call.1} parent=0
    #allocation3 [shape = 'u8[16384]{0}', space=vmem, size = 0x4000, scoped, tag = 'input window, operand 0']
    #allocation4 [shape = 'u8[16384]{0}', space=vmem, size = 0x4000, scoped, tag = 'output window, operand 0']
    #allocation5 [shape = 'u8[1024]{0}', space=vmem, size = 0x400, scoped, tag = 'output window, operand 1, single buffered']
    #allocation6 [shape = 's32[2]{0}', space=sflag, size = 0x8, scoped, tag = 'scoped memory for tpu_custom_call.1']
    #allocation7 [shape = 'u8[16384]{0}', space=vmem, size = 0x4000, scoped, tag = 'output window, operand 2']
    #allocation8 [shape = 's32[2]{0}', space=sflag, size = 0x8, scoped, tag = 'scoped memory for tpu_custom_call.1']
    %17 = vsyncpa [#allocation6], 0
    %18 = vsyncpa [#allocation8], 0
    %s19 = scalar_lea.sflag [#allocation8], 1
    %20 = vsyncpa %s19, 0
    loop: start=0, step=1, limit=4
    $region2: #{tpu_custom_call.1} parent=1 // loop_pre_header
      _
    $region3: #{tpu_custom_call.1} parent=1 // loop_header
      %s22 = sphi 0, %s26
      %p23 = scmp.ge.s32.totalorder %s22, 4
      %s29 = sphi 0, %s41
      %s30 = sphi 0, %s37
      %s31 = sphi 0, %s29
      %s32 = sphi 0, %s30
      %s33 = sphi 0, %s31
      %s34 = sphi 0, %s32
      %s46 = sphi 0, %s48
      %s49 = sphi 0, %s46
      %s50 = sphi 0, %s49
      %s66 = sphi 0, %s50
      %s74 = sphi 0, %s76
      %s77 = sphi 0, %s74
      %s78 = sphi 0, %s77
      %s94 = sphi 0, %s78
      %s100 = sphi 0, %s102
      %s103 = sphi 0, %s100
      %s104 = sphi 0, %s103
      %s120 = sphi 0, %s104
      %s124 = sphi 0, %s124
      %s126 = sphi 0, %s124
      %s127 = sphi 0, %s126
      %s141 = sphi 0, %s127
      %s145 = sphi 0, %s145
      %s147 = sphi 0, %s145
      %s148 = sphi 0, %s147
      %s162 = sphi 0, %s148
      %s166 = sphi 0, %s166
      %s168 = sphi 0, %s166
      %s169 = sphi 0, %s168
      %s183 = sphi 0, %s169
      %s187 = sphi 0, %s187
      %s189 = sphi 0, %s187
      %s190 = sphi 0, %s189
      %s204 = sphi 0, %s190
      %s208 = sphi 0, %s208
      %s210 = sphi 0, %s208
      %s211 = sphi 0, %s210
      %s225 = sphi 0, %s211
      %s229 = sphi 0, %s229
      %s231 = sphi 0, %s229
      %s232 = sphi 0, %s231
      %s246 = sphi 0, %s232
      %s254 = sphi 0, %s256
      %s257 = sphi 0, %s254
      %s258 = sphi 0, %s257
      %s274 = sphi 0, %s258
      %s280 = sphi 0, %s282
      %s283 = sphi 0, %s280
      %s284 = sphi 0, %s283
      %s300 = sphi 0, %s284
      %s308 = sphi 0, %s310
      %s311 = sphi 0, %s308
      %s312 = sphi 0, %s311
      %s328 = sphi 0, %s312
    $region4: #{tpu_custom_call.1} parent=1 // loop_header_branch
      %25 = sbr.rel (%p23) target = $region8
    $region5: #{tpu_custom_call.1} parent=1 // loop_body
      %s27 = ssub.s32 %s22, 1
      %s28 = ssub.s32 %s22, 2
      %s35 = sadd.s32 1, %s30
      %p36 = scmp.ge.s32.totalorder %s35, 2
      %s37 = scalar_select %p36, 0, %s35
      %s38 = sadd.s32 1, %s29
      %s39 = scalar_select %p36, %s38, %s29
      %p40 = scmp.ge.s32.totalorder %s39, 1
      %s41 = scalar_select %p40, 0, %s39
      %s42 = ssub.s32 %s29, %s41
      %s43 = ssub.s32 %s30, %s37
      %s44 = sor.u32 %s42, %s43
      %p45 = scmp.eq.s32.totalorder %s44, 0
      %s47 = sadd.s32 %s46, 1
      %s48 = scalar_select %p45, %s46, %s47
      %p51 = pneg %p45
      %p52 = scmp.eq.s32.totalorder %s22, 1
      %p53 = por %p51, %p52
      %p54 = scmp.ne.s32.totalorder %s46, %s49
      %p55 = scmp.eq.s32.totalorder %s22, 0
      %p56 = por %p54, %p55
      %p57 = scmp.ne.s32.totalorder %s46, %s49
      %p58 = scmp.eq.s32.totalorder %s27, 1
      %p59 = por %p57, %p58
      %p60 = scmp.ne.s32.totalorder %s49, %s50
      %p61 = scmp.eq.s32.totalorder %s27, 0
      %p62 = por %p60, %p61
      %p63 = scmp.ne.s32.totalorder %s49, %s50
      %p64 = scmp.eq.s32.totalorder %s28, 1
      %p65 = por %p63, %p64
      %p67 = scmp.ne.s32.totalorder %s50, %s66
      %p68 = scmp.eq.s32.totalorder %s28, 0
      %p69 = por %p67, %p68
      %s70 = ssub.s32 %s30, %s37
      %s71 = ssub.s32 %s29, %s41
      %s72 = sor.u32 %s70, %s71
      %p73 = scmp.eq.s32.totalorder %s72, 0
      %s75 = sadd.s32 %s74, 1
      %s76 = scalar_select %p73, %s74, %s75
      %p79 = pneg %p73
      %p80 = scmp.eq.s32.totalorder %s22, 1
      %p81 = por %p79, %p80
      %p82 = scmp.ne.s32.totalorder %s74, %s77
      %p83 = scmp.eq.s32.totalorder %s22, 0
      %p84 = por %p82, %p83
      %p85 = scmp.ne.s32.totalorder %s74, %s77
      %p86 = scmp.eq.s32.totalorder %s27, 1
      %p87 = por %p85, %p86
      %p88 = scmp.ne.s32.totalorder %s77, %s78
      %p89 = scmp.eq.s32.totalorder %s27, 0
      %p90 = por %p88, %p89
      %p91 = scmp.ne.s32.totalorder %s77, %s78
      %p92 = scmp.eq.s32.totalorder %s28, 1
      %p93 = por %p91, %p92
      %p95 = scmp.ne.s32.totalorder %s78, %s94
      %p96 = scmp.eq.s32.totalorder %s28, 0
      %p97 = por %p95, %p96
      %s98 = ssub.s32 %s29, %s41
      %p99 = scmp.eq.s32.totalorder %s98, 0
      %s101 = sadd.s32 %s100, 1
      %s102 = scalar_select %p99, %s100, %s101
      %p105 = pneg %p99
      %p106 = scmp.eq.s32.totalorder %s22, 1
      %p107 = por %p105, %p106
      %p108 = scmp.ne.s32.totalorder %s100, %s103
      %p109 = scmp.eq.s32.totalorder %s22, 0
      %p110 = por %p108, %p109
      %p111 = scmp.ne.s32.totalorder %s100, %s103
      %p112 = scmp.eq.s32.totalorder %s27, 1
      %p113 = por %p111, %p112
      %p114 = scmp.ne.s32.totalorder %s103, %s104
      %p115 = scmp.eq.s32.totalorder %s27, 0
      %p116 = por %p114, %p115
      %p117 = scmp.ne.s32.totalorder %s103, %s104
      %p118 = scmp.eq.s32.totalorder %s28, 1
      %p119 = por %p117, %p118
      %p121 = scmp.ne.s32.totalorder %s104, %s120
      %p122 = scmp.eq.s32.totalorder %s28, 0
      %p123 = por %p121, %p122
      %s125 = sadd.s32 %s124, 1
      %p128 = scmp.eq.s32.totalorder %s22, 1
      %p129 = scmp.ne.s32.totalorder %s124, %s126
      %p130 = scmp.eq.s32.totalorder %s22, 0
      %p131 = por %p129, %p130
      %p132 = scmp.ne.s32.totalorder %s124, %s126
      %p133 = scmp.eq.s32.totalorder %s27, 1
      %p134 = por %p132, %p133
      %p135 = scmp.ne.s32.totalorder %s126, %s127
      %p136 = scmp.eq.s32.totalorder %s27, 0
      %p137 = por %p135, %p136
      %p138 = scmp.ne.s32.totalorder %s126, %s127
      %p139 = scmp.eq.s32.totalorder %s28, 1
      %p140 = por %p138, %p139
      %p142 = scmp.ne.s32.totalorder %s127, %s141
      %p143 = scmp.eq.s32.totalorder %s28, 0
      %p144 = por %p142, %p143
      %s146 = sadd.s32 %s145, 1
      %p149 = scmp.eq.s32.totalorder %s22, 1
      %p150 = scmp.ne.s32.totalorder %s145, %s147
      %p151 = scmp.eq.s32.totalorder %s22, 0
      %p152 = por %p150, %p151
      %p153 = scmp.ne.s32.totalorder %s145, %s147
      %p154 = scmp.eq.s32.totalorder %s27, 1
      %p155 = por %p153, %p154
      %p156 = scmp.ne.s32.totalorder %s147, %s148
      %p157 = scmp.eq.s32.totalorder %s27, 0
      %p158 = por %p156, %p157
      %p159 = scmp.ne.s32.totalorder %s147, %s148
      %p160 = scmp.eq.s32.totalorder %s28, 1
      %p161 = por %p159, %p160
      %p163 = scmp.ne.s32.totalorder %s148, %s162
      %p164 = scmp.eq.s32.totalorder %s28, 0
      %p165 = por %p163, %p164
      %s167 = sadd.s32 %s166, 1
      %p170 = scmp.eq.s32.totalorder %s22, 1
      %p171 = scmp.ne.s32.totalorder %s166, %s168
      %p172 = scmp.eq.s32.totalorder %s22, 0
      %p173 = por %p171, %p172
      %p174 = scmp.ne.s32.totalorder %s166, %s168
      %p175 = scmp.eq.s32.totalorder %s27, 1
      %p176 = por %p174, %p175
      %p177 = scmp.ne.s32.totalorder %s168, %s169
      %p178 = scmp.eq.s32.totalorder %s27, 0
      %p179 = por %p177, %p178
      %p180 = scmp.ne.s32.totalorder %s168, %s169
      %p181 = scmp.eq.s32.totalorder %s28, 1
      %p182 = por %p180, %p181
      %p184 = scmp.ne.s32.totalorder %s169, %s183
      %p185 = scmp.eq.s32.totalorder %s28, 0
      %p186 = por %p184, %p185
      %s188 = sadd.s32 %s187, 1
      %p191 = scmp.eq.s32.totalorder %s22, 1
      %p192 = scmp.ne.s32.totalorder %s187, %s189
      %p193 = scmp.eq.s32.totalorder %s22, 0
      %p194 = por %p192, %p193
      %p195 = scmp.ne.s32.totalorder %s187, %s189
      %p196 = scmp.eq.s32.totalorder %s27, 1
      %p197 = por %p195, %p196
      %p198 = scmp.ne.s32.totalorder %s189, %s190
      %p199 = scmp.eq.s32.totalorder %s27, 0
      %p200 = por %p198, %p199
      %p201 = scmp.ne.s32.totalorder %s189, %s190
      %p202 = scmp.eq.s32.totalorder %s28, 1
      %p203 = por %p201, %p202
      %p205 = scmp.ne.s32.totalorder %s190, %s204
      %p206 = scmp.eq.s32.totalorder %s28, 0
      %p207 = por %p205, %p206
      %s209 = sadd.s32 %s208, 1
      %p212 = scmp.eq.s32.totalorder %s22, 1
      %p213 = scmp.ne.s32.totalorder %s208, %s210
      %p214 = scmp.eq.s32.totalorder %s22, 0
      %p215 = por %p213, %p214
      %p216 = scmp.ne.s32.totalorder %s208, %s210
      %p217 = scmp.eq.s32.totalorder %s27, 1
      %p218 = por %p216, %p217
      %p219 = scmp.ne.s32.totalorder %s210, %s211
      %p220 = scmp.eq.s32.totalorder %s27, 0
      %p221 = por %p219, %p220
      %p222 = scmp.ne.s32.totalorder %s210, %s211
      %p223 = scmp.eq.s32.totalorder %s28, 1
      %p224 = por %p222, %p223
      %p226 = scmp.ne.s32.totalorder %s211, %s225
      %p227 = scmp.eq.s32.totalorder %s28, 0
      %p228 = por %p226, %p227
      %s230 = sadd.s32 %s229, 1
      %p233 = scmp.eq.s32.totalorder %s22, 1
      %p234 = scmp.ne.s32.totalorder %s229, %s231
      %p235 = scmp.eq.s32.totalorder %s22, 0
      %p236 = por %p234, %p235
      %p237 = scmp.ne.s32.totalorder %s229, %s231
      %p238 = scmp.eq.s32.totalorder %s27, 1
      %p239 = por %p237, %p238
      %p240 = scmp.ne.s32.totalorder %s231, %s232
      %p241 = scmp.eq.s32.totalorder %s27, 0
      %p242 = por %p240, %p241
      %p243 = scmp.ne.s32.totalorder %s231, %s232
      %p244 = scmp.eq.s32.totalorder %s28, 1
      %p245 = por %p243, %p244
      %p247 = scmp.ne.s32.totalorder %s232, %s246
      %p248 = scmp.eq.s32.totalorder %s28, 0
      %p249 = por %p247, %p248
      %s250 = ssub.s32 %s29, %s41
      %s251 = ssub.s32 %s30, %s37
      %s252 = sor.u32 %s250, %s251
      %p253 = scmp.eq.s32.totalorder %s252, 0
      %s255 = sadd.s32 %s254, 1
      %s256 = scalar_select %p253, %s254, %s255
      %p259 = pneg %p253
      %p260 = scmp.eq.s32.totalorder %s22, 1
      %p261 = por %p259, %p260
      %p262 = scmp.ne.s32.totalorder %s254, %s257
      %p263 = scmp.eq.s32.totalorder %s22, 0
      %p264 = por %p262, %p263
      %p265 = scmp.ne.s32.totalorder %s254, %s257
      %p266 = scmp.eq.s32.totalorder %s27, 1
      %p267 = por %p265, %p266
      %p268 = scmp.ne.s32.totalorder %s257, %s258
      %p269 = scmp.eq.s32.totalorder %s27, 0
      %p270 = por %p268, %p269
      %p271 = scmp.ne.s32.totalorder %s257, %s258
      %p272 = scmp.eq.s32.totalorder %s28, 1
      %p273 = por %p271, %p272
      %p275 = scmp.ne.s32.totalorder %s258, %s274
      %p276 = scmp.eq.s32.totalorder %s28, 0
      %p277 = por %p275, %p276
      %s278 = ssub.s32 %s29, %s41
      %p279 = scmp.eq.s32.totalorder %s278, 0
      %s281 = sadd.s32 %s280, 1
      %s282 = scalar_select %p279, %s280, %s281
      %p285 = pneg %p279
      %p286 = scmp.eq.s32.totalorder %s22, 1
      %p287 = por %p285, %p286
      %p288 = scmp.ne.s32.totalorder %s280, %s283
      %p289 = scmp.eq.s32.totalorder %s22, 0
      %p290 = por %p288, %p289
      %p291 = scmp.ne.s32.totalorder %s280, %s283
      %p292 = scmp.eq.s32.totalorder %s27, 1
      %p293 = por %p291, %p292
      %p294 = scmp.ne.s32.totalorder %s283, %s284
      %p295 = scmp.eq.s32.totalorder %s27, 0
      %p296 = por %p294, %p295
      %p297 = scmp.ne.s32.totalorder %s283, %s284
      %p298 = scmp.eq.s32.totalorder %s28, 1
      %p299 = por %p297, %p298
      %p301 = scmp.ne.s32.totalorder %s284, %s300
      %p302 = scmp.eq.s32.totalorder %s28, 0
      %p303 = por %p301, %p302
      %s304 = ssub.s32 %s29, %s41
      %s305 = ssub.s32 %s30, %s37
      %s306 = sor.u32 %s304, %s305
      %p307 = scmp.eq.s32.totalorder %s306, 0
      %s309 = sadd.s32 %s308, 1
      %s310 = scalar_select %p307, %s308, %s309
      %p313 = pneg %p307
      %p314 = scmp.eq.s32.totalorder %s22, 1
      %p315 = por %p313, %p314
      %p316 = scmp.ne.s32.totalorder %s308, %s311
      %p317 = scmp.eq.s32.totalorder %s22, 0
      %p318 = por %p316, %p317
      %p319 = scmp.ne.s32.totalorder %s308, %s311
      %p320 = scmp.eq.s32.totalorder %s27, 1
      %p321 = por %p319, %p320
      %p322 = scmp.ne.s32.totalorder %s311, %s312
      %p323 = scmp.eq.s32.totalorder %s27, 0
      %p324 = por %p322, %p323
      %p325 = scmp.ne.s32.totalorder %s311, %s312
      %p326 = scmp.eq.s32.totalorder %s28, 1
      %p327 = por %p325, %p326
      %p329 = scmp.ne.s32.totalorder %s312, %s328
      %p330 = scmp.eq.s32.totalorder %s28, 0
      %p331 = por %p329, %p330
      %p332 = scmp.le.s32.totalorder 1, %s22
      %p333 = scmp.lt.s32.totalorder %s22, 3
      %p334 = pnand %p332, %p333
      %p335 = pneg %p334
      // Predicated region
      $region9: #{tpu_custom_call.1} parent=5 // pred_check
        _
      $region10: #{tpu_custom_call.1} parent=5 // pred_check_branch
        %337 = sbr.rel (%p334) target = $region12
      $region11: #{tpu_custom_call.1} parent=5 // pred_region
        %s338 = ssub.s32 %s22, 1
        // Predicated region
        $region13: #{tpu_custom_call.1} parent=11 // pred_check
          %p339 = pneg %p116
        $region14: #{tpu_custom_call.1} parent=11 // pred_check_branch
          %341 = sbr.rel (%p339) target = $region16
        $region15: #{tpu_custom_call.1} parent=11 // pred_region
          %p342 = scmp.lt.s32.totalorder %s31, 0
          %s343 = scalar_select %p342, %s31, 0
          %s344 = smul.addr %s343, 2
          %s345 = scalar_lea.vmem %s2, %s344
        $region16: #{tpu_custom_call.1} parent=11 // pred_fallthru
          _
        // Predicated region
        $region17: #{tpu_custom_call.1} parent=11 // pred_check
          %p346 = pneg %p137
        $region18: #{tpu_custom_call.1} parent=11 // pred_check_branch
          %348 = sbr.rel (%p346) target = $region20
        $region19: #{tpu_custom_call.1} parent=11 // pred_region
          _
        $region20: #{tpu_custom_call.1} parent=11 // pred_fallthru
          _
        // Predicated region
        $region21: #{tpu_custom_call.1} parent=11 // pred_check
          %p349 = pneg %p158
        $region22: #{tpu_custom_call.1} parent=11 // pred_check_branch
          %351 = sbr.rel (%p349) target = $region24
        $region23: #{tpu_custom_call.1} parent=11 // pred_region
          _
        $region24: #{tpu_custom_call.1} parent=11 // pred_fallthru
          _
        // Predicated region
        $region25: #{tpu_custom_call.1} parent=11 // pred_check
          %p352 = pneg %p179
        $region26: #{tpu_custom_call.1} parent=11 // pred_check_branch
          %354 = sbr.rel (%p352) target = $region28
        $region27: #{tpu_custom_call.1} parent=11 // pred_region
          _
        $region28: #{tpu_custom_call.1} parent=11 // pred_fallthru
          _
        // Predicated region
        $region29: #{tpu_custom_call.1} parent=11 // pred_check
          %p355 = pneg %p200
        $region30: #{tpu_custom_call.1} parent=11 // pred_check_branch
          %357 = sbr.rel (%p355) target = $region32
        $region31: #{tpu_custom_call.1} parent=11 // pred_region
          _
        $region32: #{tpu_custom_call.1} parent=11 // pred_fallthru
          _
        // Predicated region
        $region33: #{tpu_custom_call.1} parent=11 // pred_check
          %p358 = pneg %p221
        $region34: #{tpu_custom_call.1} parent=11 // pred_check_branch
          %360 = sbr.rel (%p358) target = $region36
        $region35: #{tpu_custom_call.1} parent=11 // pred_region
          _
        $region36: #{tpu_custom_call.1} parent=11 // pred_fallthru
          _
        // Predicated region
        $region37: #{tpu_custom_call.1} parent=11 // pred_check
          %p361 = pneg %p242
        $region38: #{tpu_custom_call.1} parent=11 // pred_check_branch
          %363 = sbr.rel (%p361) target = $region40
        $region39: #{tpu_custom_call.1} parent=11 // pred_region
          _
        $region40: #{tpu_custom_call.1} parent=11 // pred_fallthru
          _
      $region12: #{tpu_custom_call.1} parent=5 // pred_fallthru
        _
      %p364 = scmp.lt.s32.totalorder %s22, 2
      // Predicated region
      $region41: #{tpu_custom_call.1} parent=5 // pred_check
        %p365 = pneg %p364
      $region42: #{tpu_custom_call.1} parent=5 // pred_check_branch
        %367 = sbr.rel (%p365) target = $region44
      $region43: #{tpu_custom_call.1} parent=5 // pred_region
        // Predicated region
        $region45: #{tpu_custom_call.1} parent=43 // pred_check
          %p368 = pneg %p56
        $region46: #{tpu_custom_call.1} parent=43 // pred_check_branch
          %370 = sbr.rel (%p368) target = $region48
        $region47: #{tpu_custom_call.1} parent=43 // pred_region
          %s371 = sand.u32 %s46, 1
          %s372 = sand.u32 %s46, 1
          %s373 = smul.addr %s372, 16
          %s374 = scalar_lea.vmem [#allocation3], %s373
          %s375 = smul.u32 2, %s29
          %s376 = smul.addr %s375, 2
          %s377 = sadd.s32 %s30, %s376
          %s378 = smul.addr %s377, 8
          %s379 = scalar_lea.vmem %s0, %s378
          // Predicated region
          $region49: #{tpu_custom_call.1} parent=47 // pred_check
            _
          $region50: #{tpu_custom_call.1} parent=47 // pred_check_branch
            %381 = sbr.rel (0) target = $region52
          $region51: #{tpu_custom_call.1} parent=47 // pred_region
            // Predicated region
            $region53: #{tpu_custom_call.1} parent=51 // pred_check
              _
            $region54: #{tpu_custom_call.1} parent=51 // pred_check_branch
              %383 = sbr.rel (0) target = $region56
            $region55: #{tpu_custom_call.1} parent=51 // pred_region
              // Predicated region
              $region68: #{tpu_custom_call.1} parent=55 // pred_check
                _
              $region69: #{tpu_custom_call.1} parent=55 // pred_check_branch
                %400 = sbr.rel (0) target = $region71
              $region70: #{tpu_custom_call.1} parent=55 // pred_region
                loop: start=0, step=1, limit=1
                $region72: #{tpu_custom_call.1} parent=70 // loop_pre_header
                  _
                $region73: #{tpu_custom_call.1} parent=70 // loop_header
                  %s402 = sphi 0, %s406
                  %p403 = scmp.ge.s32.totalorder %s402, 1
                  %s407 = sphi %s379, %s379
                  %s408 = sphi %s374, %s374
                $region74: #{tpu_custom_call.1} parent=70 // loop_header_branch
                  %405 = sbr.rel (%p403) target = $region78
                $region75: #{tpu_custom_call.1} parent=70 // loop_body
                  %v409 = vld [vmem:[%s407] sm:$0xff]
                  %410 = vst [vmem:[%s408] sm:$0xff] %v409
                  %v411 = vld [vmem:[%s407 + $0x10] sm:$0xff]
                  %412 = vst [vmem:[%s408 + $0x8] sm:$0xff] %v411
                $region76: #{tpu_custom_call.1} parent=70 // loop_footer
                  %s406 = sadd.s32 1, %s402
                $region77: #{tpu_custom_call.1} parent=70 // loop_footer_branch
                  %401 = sbr.rel target = $region73
                $region78: #{tpu_custom_call.1} parent=70 // loop_exit
                  _
              $region71: #{tpu_custom_call.1} parent=55 // pred_fallthru
                _
              // Predicated region
              $region79: #{tpu_custom_call.1} parent=55 // pred_check
                _
              $region80: #{tpu_custom_call.1} parent=55 // pred_check_branch
                %414 = sbr.rel target = $region82
              $region81: #{tpu_custom_call.1} parent=55 // pred_region
                _
              $region82: #{tpu_custom_call.1} parent=55 // pred_fallthru
                _
            $region56: #{tpu_custom_call.1} parent=51 // pred_fallthru
              _
            // Predicated region
            $region57: #{tpu_custom_call.1} parent=51 // pred_check
              _
            $region58: #{tpu_custom_call.1} parent=51 // pred_check_branch
              %385 = sbr.rel target = $region60
            $region59: #{tpu_custom_call.1} parent=51 // pred_region
              loop: start=0, step=1, limit=1
              $region61: #{tpu_custom_call.1} parent=59 // loop_pre_header
                _
              $region62: #{tpu_custom_call.1} parent=59 // loop_header
                %s388 = sphi 0, %s392
                %p389 = scmp.ge.s32.totalorder %s388, 1
                %s393 = sphi %s379, %s379
                %s394 = sphi %s374, %s374
              $region63: #{tpu_custom_call.1} parent=59 // loop_header_branch
                %391 = sbr.rel (%p389) target = $region67
              $region64: #{tpu_custom_call.1} parent=59 // loop_body
                %v395 = vld [vmem:[%s393] sm:$0xff]
                %396 = vst [vmem:[%s394] sm:$0xff] %v395
                %v397 = vld [vmem:[%s393 + $0x10] sm:$0xff]
                %398 = vst [vmem:[%s394 + $0x8] sm:$0xff] %v397
              $region65: #{tpu_custom_call.1} parent=59 // loop_footer
                %s392 = sadd.s32 1, %s388
              $region66: #{tpu_custom_call.1} parent=59 // loop_footer_branch
                %387 = sbr.rel target = $region62
              $region67: #{tpu_custom_call.1} parent=59 // loop_exit
                _
            $region60: #{tpu_custom_call.1} parent=51 // pred_fallthru
              _
          $region52: #{tpu_custom_call.1} parent=47 // pred_fallthru
            _
          %415 = vnop
        $region48: #{tpu_custom_call.1} parent=43 // pred_fallthru
          _
        // Predicated region
        $region83: #{tpu_custom_call.1} parent=43 // pred_check
          %p416 = pneg %p84
        $region84: #{tpu_custom_call.1} parent=43 // pred_check_branch
          %418 = sbr.rel (%p416) target = $region86
        $region85: #{tpu_custom_call.1} parent=43 // pred_region
          %s419 = smul.u32 8, %s30
          %p420 = scmp.lt.s32.totalorder %s419, 15
          %s421 = scalar_select %p420, %s419, 15
          %p422 = scmp.lt.s32.totalorder %s29, 0
          %s423 = scalar_select %p422, %s29, 0
          %s424 = sadd.s32 %s423, %s421
          %s425 = smul.addr %s424, 2
          %s426 = scalar_lea.vmem %s1, %s425
          %s427 = smul.u32 8, %s30
        $region86: #{tpu_custom_call.1} parent=43 // pred_fallthru
          _
      $region44: #{tpu_custom_call.1} parent=5 // pred_fallthru
        _
      %p428 = scmp.le.s32.totalorder 1, %s22
      %p429 = scmp.lt.s32.totalorder %s22, 3
      %p430 = pnand %p428, %p429
      %p431 = pneg %p430
      // Predicated region
      $region87: #{tpu_custom_call.1} parent=5 // pred_check
        _
      $region88: #{tpu_custom_call.1} parent=5 // pred_check_branch
        %433 = sbr.rel (%p430) target = $region90
      $region89: #{tpu_custom_call.1} parent=5 // pred_region
        %s434 = ssub.s32 %s22, 1
        %s435 = sand.u32 %s49, 1
        %s436 = sand.u32 %s49, 1
        %s437 = smul.addr %s436, 16
        %s438 = scalar_lea.vmem [#allocation3], %s437
        // Predicated region
        $region91: #{tpu_custom_call.1} parent=89 // pred_check
          %p439 = pneg %p62
        $region92: #{tpu_custom_call.1} parent=89 // pred_check_branch
          %441 = sbr.rel (%p439) target = $region94
        $region93: #{tpu_custom_call.1} parent=89 // pred_region
          _
        $region94: #{tpu_custom_call.1} parent=89 // pred_fallthru
          _
        %s442 = sand.u32 %s49, 1
        %s443 = sand.u32 %s49, 1
        %s444 = smul.addr %s443, 16
        %s445 = scalar_lea.vmem [#allocation3], %s444
        %p446 = pneg %p62
        %p447 = pneg %p59
        %s448 = smul.u32 8, %s32
        %p449 = scmp.lt.s32.totalorder %s448, 15
        %s450 = scalar_select %p449, %s448, 15
        %p451 = scmp.lt.s32.totalorder %s31, 0
        %s452 = scalar_select %p451, %s31, 0
        %s453 = sadd.s32 %s452, %s450
        %s454 = smul.addr %s453, 2
        %s455 = scalar_lea.vmem %s1, %s454
        %p456 = pneg %p90
        %p457 = pneg %p87
        %p458 = scmp.lt.s32.totalorder %s31, 0
        %s459 = scalar_select %p458, %s31, 0
        %s460 = smul.addr %s459, 2
        %s461 = scalar_lea.vmem %s2, %s460
        %p462 = pneg %p116
        %p463 = pneg %p113
        %p464 = pneg %p137
        %p465 = pneg %p134
        %p466 = pneg %p158
        %p467 = pneg %p155
        %p468 = pneg %p179
        %p469 = pneg %p176
        %p470 = pneg %p200
        %p471 = pneg %p197
        %p472 = pneg %p221
        %p473 = pneg %p218
        %p474 = pneg %p242
        %p475 = pneg %p239
        %p476 = pneg %p270
        %p477 = pneg %p267
        %s478 = sand.u32 %s257, 1
        %s479 = sand.u32 %s257, 1
        %s480 = smul.addr %s479, 16
        %s481 = scalar_lea.vmem [#allocation4], %s480
        %p482 = pneg %p296
        %p483 = pneg %p293
        %p484 = pneg %p324
        %p485 = pneg %p321
        %s486 = sand.u32 %s311, 1
        %s487 = scalar_lea.sflag [#allocation8], %s486
        %s488 = sand.u32 %s311, 1
        %s489 = smul.addr %s488, 16
        %s490 = scalar_lea.vmem [#allocation7], %s489
        %s491 = smul.u32 2, %s31
        %s492 = smul.u32 8, %s32
        %p493 = scmp.lt.s32.totalorder %s492, 15
        %s494 = scalar_select %p493, %s492, 15
        %p495 = scmp.lt.s32.totalorder %s31, 0
        %s496 = scalar_select %p495, %s31, 0
        %s497 = sadd.s32 %s496, %s494
        %s498 = smul.addr %s497, 2
        %s499 = scalar_lea.vmem %s1, %s498
        %s500 = smul.u32 8, %s32
        %p501 = scmp.lt.s32.totalorder %s31, 0
        %s502 = scalar_select %p501, %s31, 0
        %s503 = smul.addr %s502, 2
        %s504 = scalar_lea.vmem %s2, %s503
        %s505 = smul.u32 2, %s31
        %s506 = smul.u32 2, %s31
        %p507 = scmp.eq.s32.totalorder %s32, 0
        // Predicated region
        $region95: #{tpu_custom_call.1} parent=89 // pred_check
          %p508 = pneg %p507
        $region96: #{tpu_custom_call.1} parent=89 // pred_check_branch
          %510 = sbr.rel (%p508) target = $region98
        $region97: #{tpu_custom_call.1} parent=89 // pred_region
          %v511 = vld [vmem:[%s504] sm:$0x3]
          %vm512 = vcmask 254976
          %513 = vst.msk [vmem:[#allocation2] sm:$0x3] %vm512, %v511
        $region98: #{tpu_custom_call.1} parent=89 // pred_fallthru
          _
        %v514 = vld [vmem:[%s438] sm:$0xff]
        %v515 = vld [vmem:[%s438 + $0x8] sm:$0xff]
        %v516 = vld [vmem:[%s3] sm:$0xf]
        %v517 = vld [vmem:[%s4] sm:$0x1]
        %v519 = vlaneseq
        %v520 = vshrl.u32 %v519, 7
        %v521 = vsub.s32 0, %v520
        %v522 = vrot.slane %v517, %v521
        %vm524 = vcmask 31744
        %v526 = vsel %vm524, %v514, 0
        %v529 = vsel %vm524, %v515, 0
        %vm531 = vcmask 1043456
        %v533 = vsel %vm531, %v516, 0
        %535 = vmatprep.subr.mxu0 0.0
        %536 = vmatpush1.msra.mxu0 %v533
        %537 = vmatprep.subr.mxu0 0.0
        %538 = vmatpush1.msra.mxu0 0.0
        %539 = vmatprep.subr.mxu0 0.0
        %540 = vmatpush1.msra.mxu0 0.0
        %541 = vmatprep.subr.mxu0 0.0
        %542 = vmatpush1.msra.mxu0 0.0
        %543 = vmatprep.subr.mxu0 0.0
        %544 = vmatpush1.msra.mxu0 0.0
        %545 = vmatprep.subr.mxu0 0.0
        %546 = vmatpush1.msra.mxu0 0.0
        %547 = vmatprep.subr.mxu0 0.0
        %548 = vmatpush1.msra.mxu0 0.0
        %549 = vmatprep.subr.mxu0 0.0
        %550 = vmatpush1.msra.mxu0 0.0
        %551 = vmatprep.subr.mxu0 0.0
        %552 = vmatpush1.msra.mxu0 0.0
        %553 = vmatprep.subr.mxu0 0.0
        %554 = vmatpush1.msra.mxu0 0.0
        %555 = vmatprep.subr.mxu0 0.0
        %556 = vmatpush1.msra.mxu0 0.0
        %557 = vmatprep.subr.mxu0 0.0
        %558 = vmatpush1.msra.mxu0 0.0
        %559 = vmatprep.subr.mxu0 0.0
        %560 = vmatpush1.msra.mxu0 0.0
        %561 = vmatprep.subr.mxu0 0.0
        %562 = vmatpush1.msra.mxu0 0.0
        %563 = vmatprep.subr.mxu0 0.0
        %564 = vmatpush1.msra.mxu0 0.0
        %565 = vmatprep.subr.mxu0 0.0
        %566 = vmatpush1.msra.mxu0 0.0
        %567 = vmatprep.subr.mxu0 0.0
        %568 = vmatpush1.msra.mxu0 0.0
        %569 = vmatprep.subr.mxu0 0.0
        %570 = vmatpush1.msra.mxu0 0.0
        %571 = vmatprep.subr.mxu0 0.0
        %572 = vmatpush1.msra.mxu0 0.0
        %573 = vmatprep.subr.mxu0 0.0
        %574 = vmatpush1.msra.mxu0 0.0
        %575 = vmatprep.subr.mxu0 0.0
        %576 = vmatpush1.msra.mxu0 0.0
        %577 = vmatprep.subr.mxu0 0.0
        %578 = vmatpush1.msra.mxu0 0.0
        %579 = vmatprep.subr.mxu0 0.0
        %580 = vmatpush1.msra.mxu0 0.0
        %581 = vmatprep.subr.mxu0 0.0
        %582 = vmatpush1.msra.mxu0 0.0
        %583 = vmatprep.subr.mxu0 0.0
        %584 = vmatpush1.msra.mxu0 0.0
        %585 = vmatprep.subr.mxu0 0.0
        %586 = vmatpush1.msra.mxu0 0.0
        %587 = vmatprep.subr.mxu0 0.0
        %588 = vmatpush1.msra.mxu0 0.0
        %589 = vmatprep.subr.mxu0 0.0
        %590 = vmatpush1.msra.mxu0 0.0
        %591 = vmatprep.subr.mxu0 0.0
        %592 = vmatpush1.msra.mxu0 0.0
        %593 = vmatprep.subr.mxu0 0.0
        %594 = vmatpush1.msra.mxu0 0.0
        %595 = vmatprep.subr.mxu0 0.0
        %596 = vmatpush1.msra.mxu0 0.0
        %597 = vmatprep.subr.mxu0 0.0
        %598 = vmatpush1.msra.mxu0 0.0
        %599 = vmatprep.mubr.f32.mxu0 0.0
        %600 = vmatmul.mubr.f32.gmra.mrb[0].mxu0 %v526
        %v601 = vpop.f32.mrb[0].mxu0
        %v602 = vadd.f32 %v522, %v601
        %v603 = vpop.f32.mrb[0].mxu0
        %604 = vmatprep.mubr.f32.mxu0 0.0
        %605 = vmatmul.mubr.f32.gmra.mrb[0].mxu0 %v529
        %v606 = vpop.f32.mrb[0].mxu0
        %v607 = vadd.f32 %v522, %v606
        %v608 = vpop.f32.mrb[0].mxu0
        %609 = vdwg.mxu0
        %v610 = vld [vmem:[%s5] sm:$0xff]
        %v611 = vld [vmem:[%s5 + $0x8] sm:$0xff]
        %v612 = vld [vmem:[%s5 + $0x10] sm:$0xff]
        %v613 = vld [vmem:[%s5 + $0x18] sm:$0xff]
        %v614 = vld [vmem:[%s6] sm:$0x3]
        %v615 = vld [vmem:[#allocation2] sm:$0x3]
        %v616 = vtanh.pop %v615
        %vm617 = vcmask 261120
        %v619 = vsel %vm617, %v616, 0
        %621 = vmatprep.subr.mxu0 0.0
        %622 = vmatpush1.msra.mxu0 %v610
        %623 = vmatprep.subr.mxu0 0.0
        %624 = vmatpush1.msra.mxu0 %v611
        %625 = vmatprep.subr.mxu0 0.0
        %626 = vmatpush1.msra.mxu0 %v612
        %627 = vmatprep.subr.mxu0 0.0
        %628 = vmatpush1.msra.mxu0 %v613
        %629 = vmatprep.subr.mxu0 0.0
        %630 = vmatpush1.msra.mxu0 0.0
        %631 = vmatprep.subr.mxu0 0.0
        %632 = vmatpush1.msra.mxu0 0.0
        %633 = vmatprep.subr.mxu0 0.0
        %634 = vmatpush1.msra.mxu0 0.0
        %635 = vmatprep.subr.mxu0 0.0
        %636 = vmatpush1.msra.mxu0 0.0
        %637 = vmatprep.subr.mxu0 0.0
        %638 = vmatpush1.msra.mxu0 0.0
        %639 = vmatprep.subr.mxu0 0.0
        %640 = vmatpush1.msra.mxu0 0.0
        %641 = vmatprep.subr.mxu0 0.0
        %642 = vmatpush1.msra.mxu0 0.0
        %643 = vmatprep.subr.mxu0 0.0
        %644 = vmatpush1.msra.mxu0 0.0
        %645 = vmatprep.subr.mxu0 0.0
        %646 = vmatpush1.msra.mxu0 0.0
        %647 = vmatprep.subr.mxu0 0.0
        %648 = vmatpush1.msra.mxu0 0.0
        %649 = vmatprep.subr.mxu0 0.0
        %650 = vmatpush1.msra.mxu0 0.0
        %651 = vmatprep.subr.mxu0 0.0
        %652 = vmatpush1.msra.mxu0 0.0
        %653 = vmatprep.subr.mxu0 0.0
        %654 = vmatpush1.msra.mxu0 0.0
        %655 = vmatprep.subr.mxu0 0.0
        %656 = vmatpush1.msra.mxu0 0.0
        %657 = vmatprep.subr.mxu0 0.0
        %658 = vmatpush1.msra.mxu0 0.0
        %659 = vmatprep.subr.mxu0 0.0
        %660 = vmatpush1.msra.mxu0 0.0
        %661 = vmatprep.subr.mxu0 0.0
        %662 = vmatpush1.msra.mxu0 0.0
        %663 = vmatprep.subr.mxu0 0.0
        %664 = vmatpush1.msra.mxu0 0.0
        %665 = vmatprep.subr.mxu0 0.0
        %666 = vmatpush1.msra.mxu0 0.0
        %667 = vmatprep.subr.mxu0 0.0
        %668 = vmatpush1.msra.mxu0 0.0
        %669 = vmatprep.subr.mxu0 0.0
        %670 = vmatpush1.msra.mxu0 0.0
        %671 = vmatprep.subr.mxu0 0.0
        %672 = vmatpush1.msra.mxu0 0.0
        %673 = vmatprep.subr.mxu0 0.0
        %674 = vmatpush1.msra.mxu0 0.0
        %675 = vmatprep.subr.mxu0 0.0
        %676 = vmatpush1.msra.mxu0 0.0
        %677 = vmatprep.subr.mxu0 0.0
        %678 = vmatpush1.msra.mxu0 0.0
        %679 = vmatprep.subr.mxu0 0.0
        %680 = vmatpush1.msra.mxu0 0.0
        %681 = vmatprep.subr.mxu0 0.0
        %682 = vmatpush1.msra.mxu0 0.0
        %683 = vmatprep.subr.mxu0 0.0
        %684 = vmatpush1.msra.mxu0 0.0
        %685 = vmatprep.mubr.f32.mxu0 0.0
        %686 = vmatmul.mubr.f32.gmra.mrb[0].mxu0 %v619
        %v687 = vpop.f32.mrb[0].mxu0
        %v688 = vadd.f32 0.0, %v687
        %v689 = vpop.f32.mrb[0].mxu0
        %690 = vdwg.mxu0
        %692 = vset.pattern.permute.xlu0 0
        %693 = vperm.xlu0 %692, %v688
        %v694 = vpop.permute.xlu0 %693
        %v696 = vlaneseq
        %v697 = vshrl.u32 %v696, 7
        %v698 = vsub.s32 0, %v697
        %v699 = vrot.slane %v614, %v698
        %v700 = vmul.f32 %v694, %v699
        %701 = vset.pattern.permute.xlu0 1
        %702 = vperm.xlu0 %701, %v688
        %v703 = vpop.permute.xlu0 %702
        %v705 = vlaneseq
        %v706 = vshrl.u32 %v705, 7
        %v707 = vsub.s32 1, %v706
        %v708 = vrot.slane %v614, %v707
        %v709 = vmul.f32 %v703, %v708
        %v710 = vadd.f32 %v700, %v709
        %v711 = vmul.f32 %v615, 0.8
        %v714 = vrot.slane %v607, 7
        %vm715 = vcmask 1041409
        %v716 = vsel %vm715, %v714, %v602
        %v718 = vadd.f32 %v710, %v716
        %v719 = vadd.f32 %v711, %v718
        %v720 = vld [vmem:[%s499] sm:$0x3]
        %v721 = vmul.f32 %v720, 0.05
        %v722 = vadd.f32 %v719, %v721
        %v723 = vtanh.pop %v722
        %v725 = vsel %vm617, %v723, 0
        %727 = vmatprep.subr.mxu0 0.0
        %728 = vmatpush1.msra.mxu0 %v610
        %729 = vmatprep.subr.mxu0 0.0
        %730 = vmatpush1.msra.mxu0 %v611
        %731 = vmatprep.subr.mxu0 0.0
        %732 = vmatpush1.msra.mxu0 %v612
        %733 = vmatprep.subr.mxu0 0.0
        %734 = vmatpush1.msra.mxu0 %v613
        %735 = vmatprep.subr.mxu0 0.0
        %736 = vmatpush1.msra.mxu0 0.0
        %737 = vmatprep.subr.mxu0 0.0
        %738 = vmatpush1.msra.mxu0 0.0
        %739 = vmatprep.subr.mxu0 0.0
        %740 = vmatpush1.msra.mxu0 0.0
        %741 = vmatprep.subr.mxu0 0.0
        %742 = vmatpush1.msra.mxu0 0.0
        %743 = vmatprep.subr.mxu0 0.0
        %744 = vmatpush1.msra.mxu0 0.0
        %745 = vmatprep.subr.mxu0 0.0
        %746 = vmatpush1.msra.mxu0 0.0
        %747 = vmatprep.subr.mxu0 0.0
        %748 = vmatpush1.msra.mxu0 0.0
        %749 = vmatprep.subr.mxu0 0.0
        %750 = vmatpush1.msra.mxu0 0.0
        %751 = vmatprep.subr.mxu0 0.0
        %752 = vmatpush1.msra.mxu0 0.0
        %753 = vmatprep.subr.mxu0 0.0
        %754 = vmatpush1.msra.mxu0 0.0
        %755 = vmatprep.subr.mxu0 0.0
        %756 = vmatpush1.msra.mxu0 0.0
        %757 = vmatprep.subr.mxu0 0.0
        %758 = vmatpush1.msra.mxu0 0.0
        %759 = vmatprep.subr.mxu0 0.0
        %760 = vmatpush1.msra.mxu0 0.0
        %761 = vmatprep.subr.mxu0 0.0
        %762 = vmatpush1.msra.mxu0 0.0
        %763 = vmatprep.subr.mxu0 0.0
        %764 = vmatpush1.msra.mxu0 0.0
        %765 = vmatprep.subr.mxu0 0.0
        %766 = vmatpush1.msra.mxu0 0.0
        %767 = vmatprep.subr.mxu0 0.0
        %768 = vmatpush1.msra.mxu0 0.0
        %769 = vmatprep.subr.mxu0 0.0
        %770 = vmatpush1.msra.mxu0 0.0
        %771 = vmatprep.subr.mxu0 0.0
        %772 = vmatpush1.msra.mxu0 0.0
        %773 = vmatprep.subr.mxu0 0.0
        %774 = vmatpush1.msra.mxu0 0.0
        %775 = vmatprep.subr.mxu0 0.0
        %776 = vmatpush1.msra.mxu0 0.0
        %777 = vmatprep.subr.mxu0 0.0
        %778 = vmatpush1.msra.mxu0 0.0
        %779 = vmatprep.subr.mxu0 0.0
        %780 = vmatpush1.msra.mxu0 0.0
        %781 = vmatprep.subr.mxu0 0.0
        %782 = vmatpush1.msra.mxu0 0.0
        %783 = vmatprep.subr.mxu0 0.0
        %784 = vmatpush1.msra.mxu0 0.0
        %785 = vmatprep.subr.mxu0 0.0
        %786 = vmatpush1.msra.mxu0 0.0
        %787 = vmatprep.subr.mxu0 0.0
        %788 = vmatpush1.msra.mxu0 0.0
        %789 = vmatprep.subr.mxu0 0.0
        %790 = vmatpush1.msra.mxu0 0.0
        %791 = vmatprep.mubr.f32.mxu0 0.0
        %792 = vmatmul.mubr.f32.gmra.mrb[0].mxu0 %v725
        %v793 = vpop.f32.mrb[0].mxu0
        %v794 = vadd.f32 0.0, %v793
        %v795 = vpop.f32.mrb[0].mxu0
        %796 = vdwg.mxu0
        %798 = vset.pattern.permute.xlu0 0
        %799 = vperm.xlu0 %798, %v794
        %v800 = vpop.permute.xlu0 %799
        %v802 = vmul.f32 %v800, %v699
        %803 = vset.pattern.permute.xlu0 1
        %804 = vperm.xlu0 %803, %v794
        %v805 = vpop.permute.xlu0 %804
        %v807 = vmul.f32 %v805, %v708
        %v808 = vadd.f32 %v802, %v807
        %v809 = vmul.f32 %v722, 0.8
        %v810 = vrot.slane %v602, 1
        %v811 = vsel %vm715, %v607, %v810
        %v813 = vadd.f32 %v808, %v811
        %v814 = vadd.f32 %v809, %v813
        %s815 = scalar_lea.vmem %s499, 2
        %v816 = vld [vmem:[%s815] sm:$0x3]
        %v817 = vmul.f32 %v816, 0.05
        %v818 = vadd.f32 %v814, %v817
        %v819 = vtanh.pop %v818
        %v821 = vsel %vm617, %v819, 0
        %823 = vmatprep.subr.mxu0 0.0
        %824 = vmatpush1.msra.mxu0 %v610
        %825 = vmatprep.subr.mxu0 0.0
        %826 = vmatpush1.msra.mxu0 %v611
        %827 = vmatprep.subr.mxu0 0.0
        %828 = vmatpush1.msra.mxu0 %v612
        %829 = vmatprep.subr.mxu0 0.0
        %830 = vmatpush1.msra.mxu0 %v613
        %831 = vmatprep.subr.mxu0 0.0
        %832 = vmatpush1.msra.mxu0 0.0
        %833 = vmatprep.subr.mxu0 0.0
        %834 = vmatpush1.msra.mxu0 0.0
        %835 = vmatprep.subr.mxu0 0.0
        %836 = vmatpush1.msra.mxu0 0.0
        %837 = vmatprep.subr.mxu0 0.0
        %838 = vmatpush1.msra.mxu0 0.0
        %839 = vmatprep.subr.mxu0 0.0
        %840 = vmatpush1.msra.mxu0 0.0
        %841 = vmatprep.subr.mxu0 0.0
        %842 = vmatpush1.msra.mxu0 0.0
        %843 = vmatprep.subr.mxu0 0.0
        %844 = vmatpush1.msra.mxu0 0.0
        %845 = vmatprep.subr.mxu0 0.0
        %846 = vmatpush1.msra.mxu0 0.0
        %847 = vmatprep.subr.mxu0 0.0
        %848 = vmatpush1.msra.mxu0 0.0
        %849 = vmatprep.subr.mxu0 0.0
        %850 = vmatpush1.msra.mxu0 0.0
        %851 = vmatprep.subr.mxu0 0.0
        %852 = vmatpush1.msra.mxu0 0.0
        %853 = vmatprep.subr.mxu0 0.0
        %854 = vmatpush1.msra.mxu0 0.0
        %855 = vmatprep.subr.mxu0 0.0
        %856 = vmatpush1.msra.mxu0 0.0
        %857 = vmatprep.subr.mxu0 0.0
        %858 = vmatpush1.msra.mxu0 0.0
        %859 = vmatprep.subr.mxu0 0.0
        %860 = vmatpush1.msra.mxu0 0.0
        %861 = vmatprep.subr.mxu0 0.0
        %862 = vmatpush1.msra.mxu0 0.0
        %863 = vmatprep.subr.mxu0 0.0
        %864 = vmatpush1.msra.mxu0 0.0
        %865 = vmatprep.subr.mxu0 0.0
        %866 = vmatpush1.msra.mxu0 0.0
        %867 = vmatprep.subr.mxu0 0.0
        %868 = vmatpush1.msra.mxu0 0.0
        %869 = vmatprep.subr.mxu0 0.0
        %870 = vmatpush1.msra.mxu0 0.0
        %871 = vmatprep.subr.mxu0 0.0
        %872 = vmatpush1.msra.mxu0 0.0
        %873 = vmatprep.subr.mxu0 0.0
        %874 = vmatpush1.msra.mxu0 0.0
        %875 = vmatprep.subr.mxu0 0.0
        %876 = vmatpush1.msra.mxu0 0.0
        %877 = vmatprep.subr.mxu0 0.0
        %878 = vmatpush1.msra.mxu0 0.0
        %879 = vmatprep.subr.mxu0 0.0
        %880 = vmatpush1.msra.mxu0 0.0
        %881 = vmatprep.subr.mxu0 0.0
        %882 = vmatpush1.msra.mxu0 0.0
        %883 = vmatprep.subr.mxu0 0.0
        %884 = vmatpush1.msra.mxu0 0.0
        %885 = vmatprep.subr.mxu0 0.0
        %886 = vmatpush1.msra.mxu0 0.0
        %887 = vmatprep.mubr.f32.mxu0 0.0
        %888 = vmatmul.mubr.f32.gmra.mrb[0].mxu0 %v821
        %v889 = vpop.f32.mrb[0].mxu0
        %v890 = vadd.f32 0.0, %v889
        %v891 = vpop.f32.mrb[0].mxu0
        %892 = vdwg.mxu0
        %894 = vset.pattern.permute.xlu0 0
        %895 = vperm.xlu0 %894, %v890
        %v896 = vpop.permute.xlu0 %895
        %v898 = vmul.f32 %v896, %v699
        %899 = vset.pattern.permute.xlu0 1
        %900 = vperm.xlu0 %899, %v890
        %v901 = vpop.permute.xlu0 %900
        %v903 = vmul.f32 %v901, %v708
        %v904 = vadd.f32 %v898, %v903
        %v905 = vmul.f32 %v818, 0.8
        %v906 = vrot.slane %v602, 2
        %v907 = vrot.slane %v607, 1
        %v908 = vsel %vm715, %v907, %v906
        %v910 = vadd.f32 %v904, %v908
        %v911 = vadd.f32 %v905, %v910
        %s912 = scalar_lea.vmem %s499, 4
        %v913 = vld [vmem:[%s912] sm:$0x3]
        %v914 = vmul.f32 %v913, 0.05
        %v915 = vadd.f32 %v911, %v914
        %v916 = vtanh.pop %v915
        %v918 = vsel %vm617, %v916, 0
        %920 = vmatprep.subr.mxu0 0.0
        %921 = vmatpush1.msra.mxu0 %v610
        %922 = vmatprep.subr.mxu0 0.0
        %923 = vmatpush1.msra.mxu0 %v611
        %924 = vmatprep.subr.mxu0 0.0
        %925 = vmatpush1.msra.mxu0 %v612
        %926 = vmatprep.subr.mxu0 0.0
        %927 = vmatpush1.msra.mxu0 %v613
        %928 = vmatprep.subr.mxu0 0.0
        %929 = vmatpush1.msra.mxu0 0.0
        %930 = vmatprep.subr.mxu0 0.0
        %931 = vmatpush1.msra.mxu0 0.0
        %932 = vmatprep.subr.mxu0 0.0
        %933 = vmatpush1.msra.mxu0 0.0
        %934 = vmatprep.subr.mxu0 0.0
        %935 = vmatpush1.msra.mxu0 0.0
        %936 = vmatprep.subr.mxu0 0.0
        %937 = vmatpush1.msra.mxu0 0.0
        %938 = vmatprep.subr.mxu0 0.0
        %939 = vmatpush1.msra.mxu0 0.0
        %940 = vmatprep.subr.mxu0 0.0
        %941 = vmatpush1.msra.mxu0 0.0
        %942 = vmatprep.subr.mxu0 0.0
        %943 = vmatpush1.msra.mxu0 0.0
        %944 = vmatprep.subr.mxu0 0.0
        %945 = vmatpush1.msra.mxu0 0.0
        %946 = vmatprep.subr.mxu0 0.0
        %947 = vmatpush1.msra.mxu0 0.0
        %948 = vmatprep.subr.mxu0 0.0
        %949 = vmatpush1.msra.mxu0 0.0
        %950 = vmatprep.subr.mxu0 0.0
        %951 = vmatpush1.msra.mxu0 0.0
        %952 = vmatprep.subr.mxu0 0.0
        %953 = vmatpush1.msra.mxu0 0.0
        %954 = vmatprep.subr.mxu0 0.0
        %955 = vmatpush1.msra.mxu0 0.0
        %956 = vmatprep.subr.mxu0 0.0
        %957 = vmatpush1.msra.mxu0 0.0
        %958 = vmatprep.subr.mxu0 0.0
        %959 = vmatpush1.msra.mxu0 0.0
        %960 = vmatprep.subr.mxu0 0.0
        %961 = vmatpush1.msra.mxu0 0.0
        %962 = vmatprep.subr.mxu0 0.0
        %963 = vmatpush1.msra.mxu0 0.0
        %964 = vmatprep.subr.mxu0 0.0
        %965 = vmatpush1.msra.mxu0 0.0
        %966 = vmatprep.subr.mxu0 0.0
        %967 = vmatpush1.msra.mxu0 0.0
        %968 = vmatprep.subr.mxu0 0.0
        %969 = vmatpush1.msra.mxu0 0.0
        %970 = vmatprep.subr.mxu0 0.0
        %971 = vmatpush1.msra.mxu0 0.0
        %972 = vmatprep.subr.mxu0 0.0
        %973 = vmatpush1.msra.mxu0 0.0
        %974 = vmatprep.subr.mxu0 0.0
        %975 = vmatpush1.msra.mxu0 0.0
        %976 = vmatprep.subr.mxu0 0.0
        %977 = vmatpush1.msra.mxu0 0.0
        %978 = vmatprep.subr.mxu0 0.0
        %979 = vmatpush1.msra.mxu0 0.0
        %980 = vmatprep.subr.mxu0 0.0
        %981 = vmatpush1.msra.mxu0 0.0
        %982 = vmatprep.subr.mxu0 0.0
        %983 = vmatpush1.msra.mxu0 0.0
        %984 = vmatprep.mubr.f32.mxu0 0.0
        %985 = vmatmul.mubr.f32.gmra.mrb[0].mxu0 %v918
        %v986 = vpop.f32.mrb[0].mxu0
        %v987 = vadd.f32 0.0, %v986
        %v988 = vpop.f32.mrb[0].mxu0
        %989 = vdwg.mxu0
        %991 = vset.pattern.permute.xlu0 0
        %992 = vperm.xlu0 %991, %v987
        %v993 = vpop.permute.xlu0 %992
        %v995 = vmul.f32 %v993, %v699
        %996 = vset.pattern.permute.xlu0 1
        %997 = vperm.xlu0 %996, %v987
        %v998 = vpop.permute.xlu0 %997
        %v1000 = vmul.f32 %v998, %v708
        %v1001 = vadd.f32 %v995, %v1000
        %v1002 = vmul.f32 %v915, 0.8
        %v1003 = vrot.slane %v602, 3
        %v1004 = vrot.slane %v607, 2
        %v1005 = vsel %vm715, %v1004, %v1003
        %v1007 = vadd.f32 %v1001, %v1005
        %v1008 = vadd.f32 %v1002, %v1007
        %s1009 = scalar_lea.vmem %s499, 6
        %v1010 = vld [vmem:[%s1009] sm:$0x3]
        %v1011 = vmul.f32 %v1010, 0.05
        %v1012 = vadd.f32 %v1008, %v1011
        %v1013 = vtanh.pop %v1012
        %v1015 = vsel %vm617, %v1013, 0
        %1017 = vmatprep.subr.mxu0 0.0
        %1018 = vmatpush1.msra.mxu0 %v610
        %1019 = vmatprep.subr.mxu0 0.0
        %1020 = vmatpush1.msra.mxu0 %v611
        %1021 = vmatprep.subr.mxu0 0.0
        %1022 = vmatpush1.msra.mxu0 %v612
        %1023 = vmatprep.subr.mxu0 0.0
        %1024 = vmatpush1.msra.mxu0 %v613
        %1025 = vmatprep.subr.mxu0 0.0
        %1026 = vmatpush1.msra.mxu0 0.0
        %1027 = vmatprep.subr.mxu0 0.0
        %1028 = vmatpush1.msra.mxu0 0.0
        %1029 = vmatprep.subr.mxu0 0.0
        %1030 = vmatpush1.msra.mxu0 0.0
        %1031 = vmatprep.subr.mxu0 0.0
        %1032 = vmatpush1.msra.mxu0 0.0
        %1033 = vmatprep.subr.mxu0 0.0
        %1034 = vmatpush1.msra.mxu0 0.0
        %1035 = vmatprep.subr.mxu0 0.0
        %1036 = vmatpush1.msra.mxu0 0.0
        %1037 = vmatprep.subr.mxu0 0.0
        %1038 = vmatpush1.msra.mxu0 0.0
        %1039 = vmatprep.subr.mxu0 0.0
        %1040 = vmatpush1.msra.mxu0 0.0
        %1041 = vmatprep.subr.mxu0 0.0
        %1042 = vmatpush1.msra.mxu0 0.0
        %1043 = vmatprep.subr.mxu0 0.0
        %1044 = vmatpush1.msra.mxu0 0.0
        %1045 = vmatprep.subr.mxu0 0.0
        %1046 = vmatpush1.msra.mxu0 0.0
        %1047 = vmatprep.subr.mxu0 0.0
        %1048 = vmatpush1.msra.mxu0 0.0
        %1049 = vmatprep.subr.mxu0 0.0
        %1050 = vmatpush1.msra.mxu0 0.0
        %1051 = vmatprep.subr.mxu0 0.0
        %1052 = vmatpush1.msra.mxu0 0.0
        %1053 = vmatprep.subr.mxu0 0.0
        %1054 = vmatpush1.msra.mxu0 0.0
        %1055 = vmatprep.subr.mxu0 0.0
        %1056 = vmatpush1.msra.mxu0 0.0
        %1057 = vmatprep.subr.mxu0 0.0
        %1058 = vmatpush1.msra.mxu0 0.0
        %1059 = vmatprep.subr.mxu0 0.0
        %1060 = vmatpush1.msra.mxu0 0.0
        %1061 = vmatprep.subr.mxu0 0.0
        %1062 = vmatpush1.msra.mxu0 0.0
        %1063 = vmatprep.subr.mxu0 0.0
        %1064 = vmatpush1.msra.mxu0 0.0
        %1065 = vmatprep.subr.mxu0 0.0
        %1066 = vmatpush1.msra.mxu0 0.0
        %1067 = vmatprep.subr.mxu0 0.0
        %1068 = vmatpush1.msra.mxu0 0.0
        %1069 = vmatprep.subr.mxu0 0.0
        %1070 = vmatpush1.msra.mxu0 0.0
        %1071 = vmatprep.subr.mxu0 0.0
        %1072 = vmatpush1.msra.mxu0 0.0
        %1073 = vmatprep.subr.mxu0 0.0
        %1074 = vmatpush1.msra.mxu0 0.0
        %1075 = vmatprep.subr.mxu0 0.0
        %1076 = vmatpush1.msra.mxu0 0.0
        %1077 = vmatprep.subr.mxu0 0.0
        %1078 = vmatpush1.msra.mxu0 0.0
        %1079 = vmatprep.subr.mxu0 0.0
        %1080 = vmatpush1.msra.mxu0 0.0
        %1081 = vmatprep.mubr.f32.mxu0 0.0
        %1082 = vmatmul.mubr.f32.gmra.mrb[0].mxu0 %v1015
        %v1083 = vpop.f32.mrb[0].mxu0
        %v1084 = vadd.f32 0.0, %v1083
        %v1085 = vpop.f32.mrb[0].mxu0
        %1086 = vdwg.mxu0
        %1088 = vset.pattern.permute.xlu0 0
        %1089 = vperm.xlu0 %1088, %v1084
        %v1090 = vpop.permute.xlu0 %1089
        %v1092 = vmul.f32 %v1090, %v699
        %1093 = vset.pattern.permute.xlu0 1
        %1094 = vperm.xlu0 %1093, %v1084
        %v1095 = vpop.permute.xlu0 %1094
        %v1097 = vmul.f32 %v1095, %v708
        %v1098 = vadd.f32 %v1092, %v1097
        %v1099 = vmul.f32 %v1012, 0.8
        %v1100 = vrot.slane %v602, 4
        %v1101 = vrot.slane %v607, 3
        %v1102 = vsel %vm715, %v1101, %v1100
        %v1104 = vadd.f32 %v1098, %v1102
        %v1105 = vadd.f32 %v1099, %v1104
        %s1106 = scalar_lea.vmem %s499, 8
        %v1107 = vld [vmem:[%s1106] sm:$0x3]
        %v1108 = vmul.f32 %v1107, 0.05
        %v1109 = vadd.f32 %v1105, %v1108
        %v1110 = vtanh.pop %v1109
        %v1112 = vsel %vm617, %v1110, 0
        %1114 = vmatprep.subr.mxu0 0.0
        %1115 = vmatpush1.msra.mxu0 %v610
        %1116 = vmatprep.subr.mxu0 0.0
        %1117 = vmatpush1.msra.mxu0 %v611
        %1118 = vmatprep.subr.mxu0 0.0
        %1119 = vmatpush1.msra.mxu0 %v612
        %1120 = vmatprep.subr.mxu0 0.0
        %1121 = vmatpush1.msra.mxu0 %v613
        %1122 = vmatprep.subr.mxu0 0.0
        %1123 = vmatpush1.msra.mxu0 0.0
        %1124 = vmatprep.subr.mxu0 0.0
        %1125 = vmatpush1.msra.mxu0 0.0
        %1126 = vmatprep.subr.mxu0 0.0
        %1127 = vmatpush1.msra.mxu0 0.0
        %1128 = vmatprep.subr.mxu0 0.0
        %1129 = vmatpush1.msra.mxu0 0.0
        %1130 = vmatprep.subr.mxu0 0.0
        %1131 = vmatpush1.msra.mxu0 0.0
        %1132 = vmatprep.subr.mxu0 0.0
        %1133 = vmatpush1.msra.mxu0 0.0
        %1134 = vmatprep.subr.mxu0 0.0
        %1135 = vmatpush1.msra.mxu0 0.0
        %1136 = vmatprep.subr.mxu0 0.0
        %1137 = vmatpush1.msra.mxu0 0.0
        %1138 = vmatprep.subr.mxu0 0.0
        %1139 = vmatpush1.msra.mxu0 0.0
        %1140 = vmatprep.subr.mxu0 0.0
        %1141 = vmatpush1.msra.mxu0 0.0
        %1142 = vmatprep.subr.mxu0 0.0
        %1143 = vmatpush1.msra.mxu0 0.0
        %1144 = vmatprep.subr.mxu0 0.0
        %1145 = vmatpush1.msra.mxu0 0.0
        %1146 = vmatprep.subr.mxu0 0.0
        %1147 = vmatpush1.msra.mxu0 0.0
        %1148 = vmatprep.subr.mxu0 0.0
        %1149 = vmatpush1.msra.mxu0 0.0
        %1150 = vmatprep.subr.mxu0 0.0
        %1151 = vmatpush1.msra.mxu0 0.0
        %1152 = vmatprep.subr.mxu0 0.0
        %1153 = vmatpush1.msra.mxu0 0.0
        %1154 = vmatprep.subr.mxu0 0.0
        %1155 = vmatpush1.msra.mxu0 0.0
        %1156 = vmatprep.subr.mxu0 0.0
        %1157 = vmatpush1.msra.mxu0 0.0
        %1158 = vmatprep.subr.mxu0 0.0
        %1159 = vmatpush1.msra.mxu0 0.0
        %1160 = vmatprep.subr.mxu0 0.0
        %1161 = vmatpush1.msra.mxu0 0.0
        %1162 = vmatprep.subr.mxu0 0.0
        %1163 = vmatpush1.msra.mxu0 0.0
        %1164 = vmatprep.subr.mxu0 0.0
        %1165 = vmatpush1.msra.mxu0 0.0
        %1166 = vmatprep.subr.mxu0 0.0
        %1167 = vmatpush1.msra.mxu0 0.0
        %1168 = vmatprep.subr.mxu0 0.0
        %1169 = vmatpush1.msra.mxu0 0.0
        %1170 = vmatprep.subr.mxu0 0.0
        %1171 = vmatpush1.msra.mxu0 0.0
        %1172 = vmatprep.subr.mxu0 0.0
        %1173 = vmatpush1.msra.mxu0 0.0
        %1174 = vmatprep.subr.mxu0 0.0
        %1175 = vmatpush1.msra.mxu0 0.0
        %1176 = vmatprep.subr.mxu0 0.0
        %1177 = vmatpush1.msra.mxu0 0.0
        %1178 = vmatprep.mubr.f32.mxu0 0.0
        %1179 = vmatmul.mubr.f32.gmra.mrb[0].mxu0 %v1112
        %v1180 = vpop.f32.mrb[0].mxu0
        %v1181 = vadd.f32 0.0, %v1180
        %v1182 = vpop.f32.mrb[0].mxu0
        %1183 = vdwg.mxu0
        %1185 = vset.pattern.permute.xlu0 0
        %1186 = vperm.xlu0 %1185, %v1181
        %v1187 = vpop.permute.xlu0 %1186
        %v1189 = vmul.f32 %v1187, %v699
        %1190 = vset.pattern.permute.xlu0 1
        %1191 = vperm.xlu0 %1190, %v1181
        %v1192 = vpop.permute.xlu0 %1191
        %v1194 = vmul.f32 %v1192, %v708
        %v1195 = vadd.f32 %v1189, %v1194
        %v1196 = vmul.f32 %v1109, 0.8
        %v1197 = vrot.slane %v602, 5
        %v1198 = vrot.slane %v607, 4
        %v1199 = vsel %vm715, %v1198, %v1197
        %v1201 = vadd.f32 %v1195, %v1199
        %v1202 = vadd.f32 %v1196, %v1201
        %s1203 = scalar_lea.vmem %s499, 10
        %v1204 = vld [vmem:[%s1203] sm:$0x3]
        %v1205 = vmul.f32 %v1204, 0.05
        %v1206 = vadd.f32 %v1202, %v1205
        %v1207 = vtanh.pop %v1206
        %v1209 = vsel %vm617, %v1207, 0
        %1211 = vmatprep.subr.mxu0 0.0
        %1212 = vmatpush1.msra.mxu0 %v610
        %1213 = vmatprep.subr.mxu0 0.0
        %1214 = vmatpush1.msra.mxu0 %v611
        %1215 = vmatprep.subr.mxu0 0.0
        %1216 = vmatpush1.msra.mxu0 %v612
        %1217 = vmatprep.subr.mxu0 0.0
        %1218 = vmatpush1.msra.mxu0 %v613
        %1219 = vmatprep.subr.mxu0 0.0
        %1220 = vmatpush1.msra.mxu0 0.0
        %1221 = vmatprep.subr.mxu0 0.0
        %1222 = vmatpush1.msra.mxu0 0.0
        %1223 = vmatprep.subr.mxu0 0.0
        %1224 = vmatpush1.msra.mxu0 0.0
        %1225 = vmatprep.subr.mxu0 0.0
        %1226 = vmatpush1.msra.mxu0 0.0
        %1227 = vmatprep.subr.mxu0 0.0
        %1228 = vmatpush1.msra.mxu0 0.0
        %1229 = vmatprep.subr.mxu0 0.0
        %1230 = vmatpush1.msra.mxu0 0.0
        %1231 = vmatprep.subr.mxu0 0.0
        %1232 = vmatpush1.msra.mxu0 0.0
        %1233 = vmatprep.subr.mxu0 0.0
        %1234 = vmatpush1.msra.mxu0 0.0
        %1235 = vmatprep.subr.mxu0 0.0
        %1236 = vmatpush1.msra.mxu0 0.0
        %1237 = vmatprep.subr.mxu0 0.0
        %1238 = vmatpush1.msra.mxu0 0.0
        %1239 = vmatprep.subr.mxu0 0.0
        %1240 = vmatpush1.msra.mxu0 0.0
        %1241 = vmatprep.subr.mxu0 0.0
        %1242 = vmatpush1.msra.mxu0 0.0
        %1243 = vmatprep.subr.mxu0 0.0
        %1244 = vmatpush1.msra.mxu0 0.0
        %1245 = vmatprep.subr.mxu0 0.0
        %1246 = vmatpush1.msra.mxu0 0.0
        %1247 = vmatprep.subr.mxu0 0.0
        %1248 = vmatpush1.msra.mxu0 0.0
        %1249 = vmatprep.subr.mxu0 0.0
        %1250 = vmatpush1.msra.mxu0 0.0
        %1251 = vmatprep.subr.mxu0 0.0
        %1252 = vmatpush1.msra.mxu0 0.0
        %1253 = vmatprep.subr.mxu0 0.0
        %1254 = vmatpush1.msra.mxu0 0.0
        %1255 = vmatprep.subr.mxu0 0.0
        %1256 = vmatpush1.msra.mxu0 0.0
        %1257 = vmatprep.subr.mxu0 0.0
        %1258 = vmatpush1.msra.mxu0 0.0
        %1259 = vmatprep.subr.mxu0 0.0
        %1260 = vmatpush1.msra.mxu0 0.0
        %1261 = vmatprep.subr.mxu0 0.0
        %1262 = vmatpush1.msra.mxu0 0.0
        %1263 = vmatprep.subr.mxu0 0.0
        %1264 = vmatpush1.msra.mxu0 0.0
        %1265 = vmatprep.subr.mxu0 0.0
        %1266 = vmatpush1.msra.mxu0 0.0
        %1267 = vmatprep.subr.mxu0 0.0
        %1268 = vmatpush1.msra.mxu0 0.0
        %1269 = vmatprep.subr.mxu0 0.0
        %1270 = vmatpush1.msra.mxu0 0.0
        %1271 = vmatprep.subr.mxu0 0.0
        %1272 = vmatpush1.msra.mxu0 0.0
        %1273 = vmatprep.subr.mxu0 0.0
        %1274 = vmatpush1.msra.mxu0 0.0
        %1275 = vmatprep.mubr.f32.mxu0 0.0
        %1276 = vmatmul.mubr.f32.gmra.mrb[0].mxu0 %v1209
        %v1277 = vpop.f32.mrb[0].mxu0
        %v1278 = vadd.f32 0.0, %v1277
        %v1279 = vpop.f32.mrb[0].mxu0
        %1280 = vdwg.mxu0
        %1282 = vset.pattern.permute.xlu0 0
        %1283 = vperm.xlu0 %1282, %v1278
        %v1284 = vpop.permute.xlu0 %1283
        %v1286 = vmul.f32 %v1284, %v699
        %1287 = vset.pattern.permute.xlu0 1
        %1288 = vperm.xlu0 %1287, %v1278
        %v1289 = vpop.permute.xlu0 %1288
        %v1291 = vmul.f32 %v1289, %v708
        %v1292 = vadd.f32 %v1286, %v1291
        %v1293 = vmul.f32 %v1206, 0.8
        %v1294 = vrot.slane %v602, 6
        %v1295 = vrot.slane %v607, 5
        %v1296 = vsel %vm715, %v1295, %v1294
        %v1298 = vadd.f32 %v1292, %v1296
        %v1299 = vadd.f32 %v1293, %v1298
        %s1300 = scalar_lea.vmem %s499, 12
        %v1301 = vld [vmem:[%s1300] sm:$0x3]
        %v1302 = vmul.f32 %v1301, 0.05
        %v1303 = vadd.f32 %v1299, %v1302
        %v1304 = vtanh.pop %v1303
        %v1306 = vsel %vm617, %v1304, 0
        %1308 = vmatprep.subr.mxu0 0.0
        %1309 = vmatpush1.msra.mxu0 %v610
        %1310 = vmatprep.subr.mxu0 0.0
        %1311 = vmatpush1.msra.mxu0 %v611
        %1312 = vmatprep.subr.mxu0 0.0
        %1313 = vmatpush1.msra.mxu0 %v612
        %1314 = vmatprep.subr.mxu0 0.0
        %1315 = vmatpush1.msra.mxu0 %v613
        %1316 = vmatprep.subr.mxu0 0.0
        %1317 = vmatpush1.msra.mxu0 0.0
        %1318 = vmatprep.subr.mxu0 0.0
        %1319 = vmatpush1.msra.mxu0 0.0
        %1320 = vmatprep.subr.mxu0 0.0
        %1321 = vmatpush1.msra.mxu0 0.0
        %1322 = vmatprep.subr.mxu0 0.0
        %1323 = vmatpush1.msra.mxu0 0.0
        %1324 = vmatprep.subr.mxu0 0.0
        %1325 = vmatpush1.msra.mxu0 0.0
        %1326 = vmatprep.subr.mxu0 0.0
        %1327 = vmatpush1.msra.mxu0 0.0
        %1328 = vmatprep.subr.mxu0 0.0
        %1329 = vmatpush1.msra.mxu0 0.0
        %1330 = vmatprep.subr.mxu0 0.0
        %1331 = vmatpush1.msra.mxu0 0.0
        %1332 = vmatprep.subr.mxu0 0.0
        %1333 = vmatpush1.msra.mxu0 0.0
        %1334 = vmatprep.subr.mxu0 0.0
        %1335 = vmatpush1.msra.mxu0 0.0
        %1336 = vmatprep.subr.mxu0 0.0
        %1337 = vmatpush1.msra.mxu0 0.0
        %1338 = vmatprep.subr.mxu0 0.0
        %1339 = vmatpush1.msra.mxu0 0.0
        %1340 = vmatprep.subr.mxu0 0.0
        %1341 = vmatpush1.msra.mxu0 0.0
        %1342 = vmatprep.subr.mxu0 0.0
        %1343 = vmatpush1.msra.mxu0 0.0
        %1344 = vmatprep.subr.mxu0 0.0
        %1345 = vmatpush1.msra.mxu0 0.0
        %1346 = vmatprep.subr.mxu0 0.0
        %1347 = vmatpush1.msra.mxu0 0.0
        %1348 = vmatprep.subr.mxu0 0.0
        %1349 = vmatpush1.msra.mxu0 0.0
        %1350 = vmatprep.subr.mxu0 0.0
        %1351 = vmatpush1.msra.mxu0 0.0
        %1352 = vmatprep.subr.mxu0 0.0
        %1353 = vmatpush1.msra.mxu0 0.0
        %1354 = vmatprep.subr.mxu0 0.0
        %1355 = vmatpush1.msra.mxu0 0.0
        %1356 = vmatprep.subr.mxu0 0.0
        %1357 = vmatpush1.msra.mxu0 0.0
        %1358 = vmatprep.subr.mxu0 0.0
        %1359 = vmatpush1.msra.mxu0 0.0
        %1360 = vmatprep.subr.mxu0 0.0
        %1361 = vmatpush1.msra.mxu0 0.0
        %1362 = vmatprep.subr.mxu0 0.0
        %1363 = vmatpush1.msra.mxu0 0.0
        %1364 = vmatprep.subr.mxu0 0.0
        %1365 = vmatpush1.msra.mxu0 0.0
        %1366 = vmatprep.subr.mxu0 0.0
        %1367 = vmatpush1.msra.mxu0 0.0
        %1368 = vmatprep.subr.mxu0 0.0
        %1369 = vmatpush1.msra.mxu0 0.0
        %1370 = vmatprep.subr.mxu0 0.0
        %1371 = vmatpush1.msra.mxu0 0.0
        %1372 = vmatprep.mubr.f32.mxu0 0.0
        %1373 = vmatmul.mubr.f32.gmra.mrb[0].mxu0 %v1306
        %v1374 = vpop.f32.mrb[0].mxu0
        %v1375 = vadd.f32 0.0, %v1374
        %v1376 = vpop.f32.mrb[0].mxu0
        %1377 = vdwg.mxu0
        %1379 = vset.pattern.permute.xlu0 0
        %1380 = vperm.xlu0 %1379, %v1375
        %v1381 = vpop.permute.xlu0 %1380
        %v1383 = vmul.f32 %v1381, %v699
        %1384 = vset.pattern.permute.xlu0 1
        %1385 = vperm.xlu0 %1384, %v1375
        %v1386 = vpop.permute.xlu0 %1385
        %v1388 = vmul.f32 %v1386, %v708
        %v1389 = vadd.f32 %v1383, %v1388
        %v1390 = vmul.f32 %v1303, 0.8
        %v1391 = vrot.slane %v602, 7
        %v1392 = vrot.slane %v607, 6
        %v1393 = vsel %vm715, %v1392, %v1391
        %v1395 = vadd.f32 %v1389, %v1393
        %v1396 = vadd.f32 %v1390, %v1395
        %s1397 = scalar_lea.vmem %s499, 14
        %v1398 = vld [vmem:[%s1397] sm:$0x3]
        %v1399 = vmul.f32 %v1398, 0.05
        %v1400 = vadd.f32 %v1396, %v1399
        %v1401 = vtanh.pop %v1400
        %vm1402 = vcmask 254976
        %1403 = vst.msk [vmem:[#allocation2] sm:$0x3] %vm1402, %v1400
        %1404 = vst.msk [vmem:[#allocation5] sm:$0x3] %vm1402, %v1400
        %v1407 = vunpack.c.l.s4 1966171168
        %v1408 = vunpack.c.0.s8 %v1407
        %v1409 = vlaneseq
        %v1410 = vshrl.u32 %v1409, 7
        %v1411 = vsub.s32 %v1408, %v1410
        %v1412 = vrot.slane %v722, %v1411
        %v1413 = vcombine.high %v1412, %v1412
        %v1415 = vunpack.c.l.s4 1966171168
        %v1416 = vunpack.c.0.s8 %v1415
        %v1417 = vlaneseq
        %v1418 = vshrl.u32 %v1417, 7
        %v1419 = vsub.s32 %v1416, %v1418
        %v1420 = vrot.slane %v1412, %v1419
        %v1422 = vunpack.c.l.s4 1966171168
        %v1423 = vunpack.c.0.s8 %v1422
        %v1424 = vlaneseq
        %v1425 = vshrl.u32 %v1424, 7
        %v1426 = vsub.s32 %v1423, %v1425
        %v1427 = vrot.slane %v1413, %v1426
        %v1432 = vunpack.c.l.s4 1966171168
        %v1433 = vunpack.c.0.s8 %v1432
        %v1434 = vlaneseq
        %v1435 = vshrl.u32 %v1434, 7
        %v1436 = vsub.s32 %v1433, %v1435
        %v1437 = vrot.slane %v818, %v1436
        %v1438 = vcombine.high %v1437, %v1437
        %v1440 = vunpack.c.l.s4 1966171168
        %v1441 = vunpack.c.0.s8 %v1440
        %v1442 = vlaneseq
        %v1443 = vshrl.u32 %v1442, 7
        %v1444 = vsub.s32 %v1441, %v1443
        %v1445 = vrot.slane %v1437, %v1444
        %v1447 = vunpack.c.l.s4 1966171168
        %v1448 = vunpack.c.0.s8 %v1447
        %v1449 = vlaneseq
        %v1450 = vshrl.u32 %v1449, 7
        %v1451 = vsub.s32 %v1448, %v1450
        %v1452 = vrot.slane %v1438, %v1451
        %v1455 = vunpack.c.l.s4 1966171168
        %v1456 = vunpack.c.0.s8 %v1455
        %v1457 = vlaneseq
        %v1458 = vshrl.u32 %v1457, 7
        %v1459 = vsub.s32 %v1456, %v1458
        %v1460 = vrot.slane %v915, %v1459
        %v1461 = vcombine.high %v1460, %v1460
        %v1463 = vunpack.c.l.s4 1966171168
        %v1464 = vunpack.c.0.s8 %v1463
        %v1465 = vlaneseq
        %v1466 = vshrl.u32 %v1465, 7
        %v1467 = vsub.s32 %v1464, %v1466
        %v1468 = vrot.slane %v1460, %v1467
        %v1470 = vunpack.c.l.s4 1966171168
        %v1471 = vunpack.c.0.s8 %v1470
        %v1472 = vlaneseq
        %v1473 = vshrl.u32 %v1472, 7
        %v1474 = vsub.s32 %v1471, %v1473
        %v1475 = vrot.slane %v1461, %v1474
        %v1478 = vunpack.c.l.s4 1966171168
        %v1479 = vunpack.c.0.s8 %v1478
        %v1480 = vlaneseq
        %v1481 = vshrl.u32 %v1480, 7
        %v1482 = vsub.s32 %v1479, %v1481
        %v1483 = vrot.slane %v1012, %v1482
        %v1484 = vcombine.high %v1483, %v1483
        %v1486 = vunpack.c.l.s4 1966171168
        %v1487 = vunpack.c.0.s8 %v1486
        %v1488 = vlaneseq
        %v1489 = vshrl.u32 %v1488, 7
        %v1490 = vsub.s32 %v1487, %v1489
        %v1491 = vrot.slane %v1483, %v1490
        %v1493 = vunpack.c.l.s4 1966171168
        %v1494 = vunpack.c.0.s8 %v1493
        %v1495 = vlaneseq
        %v1496 = vshrl.u32 %v1495, 7
        %v1497 = vsub.s32 %v1494, %v1496
        %v1498 = vrot.slane %v1484, %v1497
        %v1501 = vunpack.c.l.s4 1966171168
        %v1502 = vunpack.c.0.s8 %v1501
        %v1503 = vlaneseq
        %v1504 = vshrl.u32 %v1503, 7
        %v1505 = vsub.s32 %v1502, %v1504
        %v1506 = vrot.slane %v1109, %v1505
        %v1507 = vcombine.high %v1506, %v1506
        %v1509 = vunpack.c.l.s4 1966171168
        %v1510 = vunpack.c.0.s8 %v1509
        %v1511 = vlaneseq
        %v1512 = vshrl.u32 %v1511, 7
        %v1513 = vsub.s32 %v1510, %v1512
        %v1514 = vrot.slane %v1506, %v1513
        %v1516 = vunpack.c.l.s4 1966171168
        %v1517 = vunpack.c.0.s8 %v1516
        %v1518 = vlaneseq
        %v1519 = vshrl.u32 %v1518, 7
        %v1520 = vsub.s32 %v1517, %v1519
        %v1521 = vrot.slane %v1507, %v1520
        %v1524 = vunpack.c.l.s4 1966171168
        %v1525 = vunpack.c.0.s8 %v1524
        %v1526 = vlaneseq
        %v1527 = vshrl.u32 %v1526, 7
        %v1528 = vsub.s32 %v1525, %v1527
        %v1529 = vrot.slane %v1206, %v1528
        %v1530 = vcombine.high %v1529, %v1529
        %v1532 = vunpack.c.l.s4 1966171168
        %v1533 = vunpack.c.0.s8 %v1532
        %v1534 = vlaneseq
        %v1535 = vshrl.u32 %v1534, 7
        %v1536 = vsub.s32 %v1533, %v1535
        %v1537 = vrot.slane %v1529, %v1536
        %v1539 = vunpack.c.l.s4 1966171168
        %v1540 = vunpack.c.0.s8 %v1539
        %v1541 = vlaneseq
        %v1542 = vshrl.u32 %v1541, 7
        %v1543 = vsub.s32 %v1540, %v1542
        %v1544 = vrot.slane %v1530, %v1543
        %v1547 = vunpack.c.l.s4 1966171168
        %v1548 = vunpack.c.0.s8 %v1547
        %v1549 = vlaneseq
        %v1550 = vshrl.u32 %v1549, 7
        %v1551 = vsub.s32 %v1548, %v1550
        %v1552 = vrot.slane %v1303, %v1551
        %v1553 = vcombine.high %v1552, %v1552
        %v1555 = vunpack.c.l.s4 1966171168
        %v1556 = vunpack.c.0.s8 %v1555
        %v1557 = vlaneseq
        %v1558 = vshrl.u32 %v1557, 7
        %v1559 = vsub.s32 %v1556, %v1558
        %v1560 = vrot.slane %v1552, %v1559
        %v1562 = vunpack.c.l.s4 1966171168
        %v1563 = vunpack.c.0.s8 %v1562
        %v1564 = vlaneseq
        %v1565 = vshrl.u32 %v1564, 7
        %v1566 = vsub.s32 %v1563, %v1565
        %v1567 = vrot.slane %v1553, %v1566
        %v1570 = vunpack.c.l.s4 1966171168
        %v1571 = vunpack.c.0.s8 %v1570
        %v1572 = vlaneseq
        %v1573 = vshrl.u32 %v1572, 7
        %v1574 = vsub.s32 %v1571, %v1573
        %v1575 = vrot.slane %v1400, %v1574
        %v1576 = vcombine.high %v1575, %v1575
        %v1578 = vunpack.c.l.s4 1966171168
        %v1579 = vunpack.c.0.s8 %v1578
        %v1580 = vlaneseq
        %v1581 = vshrl.u32 %v1580, 7
        %v1582 = vsub.s32 %v1579, %v1581
        %v1583 = vrot.slane %v1575, %v1582
        %v1585 = vunpack.c.l.s4 1966171168
        %v1586 = vunpack.c.0.s8 %v1585
        %v1587 = vlaneseq
        %v1588 = vshrl.u32 %v1587, 7
        %v1589 = vsub.s32 %v1586, %v1588
        %v1590 = vrot.slane %v1576, %v1589
        %v1591 = vlaneseq
        %v1592 = vshrl.u32 %v1591, 7
        %v1593 = vsub.s32 0, %v1592
        %v1594 = vrot.slane %v1445, %v1593
        %v1595 = vlaneseq
        %v1596 = vshrl.u32 %v1595, 7
        %v1597 = vsub.s32 0, %v1596
        %v1598 = vrot.slane %v1452, %v1597
        %v1601 = vlaneseq
        %v1602 = vshrl.u32 %v1601, 7
        %v1603 = vsub.s32 0, %v1602
        %v1604 = vrot.slane %v1468, %v1603
        %v1605 = vlaneseq
        %v1606 = vshrl.u32 %v1605, 7
        %v1607 = vsub.s32 0, %v1606
        %v1608 = vrot.slane %v1475, %v1607
        %v1611 = vlaneseq
        %v1612 = vshrl.u32 %v1611, 7
        %v1613 = vsub.s32 0, %v1612
        %v1614 = vrot.slane %v1491, %v1613
        %v1615 = vlaneseq
        %v1616 = vshrl.u32 %v1615, 7
        %v1617 = vsub.s32 0, %v1616
        %v1618 = vrot.slane %v1498, %v1617
        %v1621 = vlaneseq
        %v1622 = vshrl.u32 %v1621, 7
        %v1623 = vsub.s32 0, %v1622
        %v1624 = vrot.slane %v1514, %v1623
        %v1625 = vlaneseq
        %v1626 = vshrl.u32 %v1625, 7
        %v1627 = vsub.s32 0, %v1626
        %v1628 = vrot.slane %v1521, %v1627
        %v1631 = vlaneseq
        %v1632 = vshrl.u32 %v1631, 7
        %v1633 = vsub.s32 0, %v1632
        %v1634 = vrot.slane %v1537, %v1633
        %v1635 = vlaneseq
        %v1636 = vshrl.u32 %v1635, 7
        %v1637 = vsub.s32 0, %v1636
        %v1638 = vrot.slane %v1544, %v1637
        %v1641 = vlaneseq
        %v1642 = vshrl.u32 %v1641, 7
        %v1643 = vsub.s32 0, %v1642
        %v1644 = vrot.slane %v1560, %v1643
        %v1645 = vlaneseq
        %v1646 = vshrl.u32 %v1645, 7
        %v1647 = vsub.s32 0, %v1646
        %v1648 = vrot.slane %v1567, %v1647
        %v1651 = vlaneseq
        %v1652 = vshrl.u32 %v1651, 7
        %v1653 = vsub.s32 0, %v1652
        %v1654 = vrot.slane %v1583, %v1653
        %v1655 = vlaneseq
        %v1656 = vshrl.u32 %v1655, 7
        %v1657 = vsub.s32 0, %v1656
        %v1658 = vrot.slane %v1590, %v1657
        %vm1661 = vcmask 1040384
        %v1662 = vsel %vm1661, %v1420, %v1594
        %v1663 = vsel %vm1661, %v1427, %v1598
        %vm1664 = vcmask 1041408
        %v1665 = vsel %vm1664, %v1662, %v1604
        %v1666 = vsel %vm1664, %v1663, %v1608
        %vm1667 = vcmask 1042432
        %v1668 = vsel %vm1667, %v1665, %v1614
        %v1669 = vsel %vm1667, %v1666, %v1618
        %v1670 = vsel %vm531, %v1668, %v1624
        %v1671 = vsel %vm531, %v1669, %v1628
        %vm1672 = vcmask 1044480
        %v1673 = vsel %vm1672, %v1670, %v1634
        %v1674 = vsel %vm1672, %v1671, %v1638
        %vm1675 = vcmask 1045504
        %v1676 = vsel %vm1675, %v1673, %v1644
        %v1677 = vsel %vm1675, %v1674, %v1648
        %vm1678 = vcmask 1046528
        %v1679 = vsel %vm1678, %v1676, %v1654
        %v1680 = vsel %vm1678, %v1677, %v1658
        %1681 = vst.msk [vmem:[%s490] sm:$0xff] %vm617, %v1679
        %1682 = vst.msk [vmem:[%s490 + $0x8] sm:$0xff] %vm617, %v1680
        %v1684 = vunpack.c.l.s4 1966171168
        %v1685 = vunpack.c.0.s8 %v1684
        %v1686 = vlaneseq
        %v1687 = vshrl.u32 %v1686, 7
        %v1688 = vsub.s32 %v1685, %v1687
        %v1689 = vrot.slane %v723, %v1688
        %v1690 = vcombine.high %v1689, %v1689
        %v1692 = vunpack.c.l.s4 1966171168
        %v1693 = vunpack.c.0.s8 %v1692
        %v1694 = vlaneseq
        %v1695 = vshrl.u32 %v1694, 7
        %v1696 = vsub.s32 %v1693, %v1695
        %v1697 = vrot.slane %v1689, %v1696
        %v1699 = vunpack.c.l.s4 1966171168
        %v1700 = vunpack.c.0.s8 %v1699
        %v1701 = vlaneseq
        %v1702 = vshrl.u32 %v1701, 7
        %v1703 = vsub.s32 %v1700, %v1702
        %v1704 = vrot.slane %v1690, %v1703
        %v1708 = vunpack.c.l.s4 1966171168
        %v1709 = vunpack.c.0.s8 %v1708
        %v1710 = vlaneseq
        %v1711 = vshrl.u32 %v1710, 7
        %v1712 = vsub.s32 %v1709, %v1711
        %v1713 = vrot.slane %v819, %v1712
        %v1714 = vcombine.high %v1713, %v1713
        %v1716 = vunpack.c.l.s4 1966171168
        %v1717 = vunpack.c.0.s8 %v1716
        %v1718 = vlaneseq
        %v1719 = vshrl.u32 %v1718, 7
        %v1720 = vsub.s32 %v1717, %v1719
        %v1721 = vrot.slane %v1713, %v1720
        %v1723 = vunpack.c.l.s4 1966171168
        %v1724 = vunpack.c.0.s8 %v1723
        %v1725 = vlaneseq
        %v1726 = vshrl.u32 %v1725, 7
        %v1727 = vsub.s32 %v1724, %v1726
        %v1728 = vrot.slane %v1714, %v1727
        %v1730 = vunpack.c.l.s4 1966171168
        %v1731 = vunpack.c.0.s8 %v1730
        %v1732 = vlaneseq
        %v1733 = vshrl.u32 %v1732, 7
        %v1734 = vsub.s32 %v1731, %v1733
        %v1735 = vrot.slane %v916, %v1734
        %v1736 = vcombine.high %v1735, %v1735
        %v1738 = vunpack.c.l.s4 1966171168
        %v1739 = vunpack.c.0.s8 %v1738
        %v1740 = vlaneseq
        %v1741 = vshrl.u32 %v1740, 7
        %v1742 = vsub.s32 %v1739, %v1741
        %v1743 = vrot.slane %v1735, %v1742
        %v1745 = vunpack.c.l.s4 1966171168
        %v1746 = vunpack.c.0.s8 %v1745
        %v1747 = vlaneseq
        %v1748 = vshrl.u32 %v1747, 7
        %v1749 = vsub.s32 %v1746, %v1748
        %v1750 = vrot.slane %v1736, %v1749
        %v1752 = vunpack.c.l.s4 1966171168
        %v1753 = vunpack.c.0.s8 %v1752
        %v1754 = vlaneseq
        %v1755 = vshrl.u32 %v1754, 7
        %v1756 = vsub.s32 %v1753, %v1755
        %v1757 = vrot.slane %v1013, %v1756
        %v1758 = vcombine.high %v1757, %v1757
        %v1760 = vunpack.c.l.s4 1966171168
        %v1761 = vunpack.c.0.s8 %v1760
        %v1762 = vlaneseq
        %v1763 = vshrl.u32 %v1762, 7
        %v1764 = vsub.s32 %v1761, %v1763
        %v1765 = vrot.slane %v1757, %v1764
        %v1767 = vunpack.c.l.s4 1966171168
        %v1768 = vunpack.c.0.s8 %v1767
        %v1769 = vlaneseq
        %v1770 = vshrl.u32 %v1769, 7
        %v1771 = vsub.s32 %v1768, %v1770
        %v1772 = vrot.slane %v1758, %v1771
        %v1774 = vunpack.c.l.s4 1966171168
        %v1775 = vunpack.c.0.s8 %v1774
        %v1776 = vlaneseq
        %v1777 = vshrl.u32 %v1776, 7
        %v1778 = vsub.s32 %v1775, %v1777
        %v1779 = vrot.slane %v1110, %v1778
        %v1780 = vcombine.high %v1779, %v1779
        %v1782 = vunpack.c.l.s4 1966171168
        %v1783 = vunpack.c.0.s8 %v1782
        %v1784 = vlaneseq
        %v1785 = vshrl.u32 %v1784, 7
        %v1786 = vsub.s32 %v1783, %v1785
        %v1787 = vrot.slane %v1779, %v1786
        %v1789 = vunpack.c.l.s4 1966171168
        %v1790 = vunpack.c.0.s8 %v1789
        %v1791 = vlaneseq
        %v1792 = vshrl.u32 %v1791, 7
        %v1793 = vsub.s32 %v1790, %v1792
        %v1794 = vrot.slane %v1780, %v1793
        %v1796 = vunpack.c.l.s4 1966171168
        %v1797 = vunpack.c.0.s8 %v1796
        %v1798 = vlaneseq
        %v1799 = vshrl.u32 %v1798, 7
        %v1800 = vsub.s32 %v1797, %v1799
        %v1801 = vrot.slane %v1207, %v1800
        %v1802 = vcombine.high %v1801, %v1801
        %v1804 = vunpack.c.l.s4 1966171168
        %v1805 = vunpack.c.0.s8 %v1804
        %v1806 = vlaneseq
        %v1807 = vshrl.u32 %v1806, 7
        %v1808 = vsub.s32 %v1805, %v1807
        %v1809 = vrot.slane %v1801, %v1808
        %v1811 = vunpack.c.l.s4 1966171168
        %v1812 = vunpack.c.0.s8 %v1811
        %v1813 = vlaneseq
        %v1814 = vshrl.u32 %v1813, 7
        %v1815 = vsub.s32 %v1812, %v1814
        %v1816 = vrot.slane %v1802, %v1815
        %v1818 = vunpack.c.l.s4 1966171168
        %v1819 = vunpack.c.0.s8 %v1818
        %v1820 = vlaneseq
        %v1821 = vshrl.u32 %v1820, 7
        %v1822 = vsub.s32 %v1819, %v1821
        %v1823 = vrot.slane %v1304, %v1822
        %v1824 = vcombine.high %v1823, %v1823
        %v1826 = vunpack.c.l.s4 1966171168
        %v1827 = vunpack.c.0.s8 %v1826
        %v1828 = vlaneseq
        %v1829 = vshrl.u32 %v1828, 7
        %v1830 = vsub.s32 %v1827, %v1829
        %v1831 = vrot.slane %v1823, %v1830
        %v1833 = vunpack.c.l.s4 1966171168
        %v1834 = vunpack.c.0.s8 %v1833
        %v1835 = vlaneseq
        %v1836 = vshrl.u32 %v1835, 7
        %v1837 = vsub.s32 %v1834, %v1836
        %v1838 = vrot.slane %v1824, %v1837
        %v1841 = vunpack.c.l.s4 1966171168
        %v1842 = vunpack.c.0.s8 %v1841
        %v1843 = vlaneseq
        %v1844 = vshrl.u32 %v1843, 7
        %v1845 = vsub.s32 %v1842, %v1844
        %v1846 = vrot.slane %v1401, %v1845
        %v1847 = vcombine.high %v1846, %v1846
        %v1849 = vunpack.c.l.s4 1966171168
        %v1850 = vunpack.c.0.s8 %v1849
        %v1851 = vlaneseq
        %v1852 = vshrl.u32 %v1851, 7
        %v1853 = vsub.s32 %v1850, %v1852
        %v1854 = vrot.slane %v1846, %v1853
        %v1856 = vunpack.c.l.s4 1966171168
        %v1857 = vunpack.c.0.s8 %v1856
        %v1858 = vlaneseq
        %v1859 = vshrl.u32 %v1858, 7
        %v1860 = vsub.s32 %v1857, %v1859
        %v1861 = vrot.slane %v1847, %v1860
        %v1862 = vlaneseq
        %v1863 = vshrl.u32 %v1862, 7
        %v1864 = vsub.s32 0, %v1863
        %v1865 = vrot.slane %v1721, %v1864
        %v1866 = vlaneseq
        %v1867 = vshrl.u32 %v1866, 7
        %v1868 = vsub.s32 0, %v1867
        %v1869 = vrot.slane %v1728, %v1868
        %v1872 = vlaneseq
        %v1873 = vshrl.u32 %v1872, 7
        %v1874 = vsub.s32 0, %v1873
        %v1875 = vrot.slane %v1743, %v1874
        %v1876 = vlaneseq
        %v1877 = vshrl.u32 %v1876, 7
        %v1878 = vsub.s32 0, %v1877
        %v1879 = vrot.slane %v1750, %v1878
        %v1882 = vlaneseq
        %v1883 = vshrl.u32 %v1882, 7
        %v1884 = vsub.s32 0, %v1883
        %v1885 = vrot.slane %v1765, %v1884
        %v1886 = vlaneseq
        %v1887 = vshrl.u32 %v1886, 7
        %v1888 = vsub.s32 0, %v1887
        %v1889 = vrot.slane %v1772, %v1888
        %v1892 = vlaneseq
        %v1893 = vshrl.u32 %v1892, 7
        %v1894 = vsub.s32 0, %v1893
        %v1895 = vrot.slane %v1787, %v1894
        %v1896 = vlaneseq
        %v1897 = vshrl.u32 %v1896, 7
        %v1898 = vsub.s32 0, %v1897
        %v1899 = vrot.slane %v1794, %v1898
        %v1902 = vlaneseq
        %v1903 = vshrl.u32 %v1902, 7
        %v1904 = vsub.s32 0, %v1903
        %v1905 = vrot.slane %v1809, %v1904
        %v1906 = vlaneseq
        %v1907 = vshrl.u32 %v1906, 7
        %v1908 = vsub.s32 0, %v1907
        %v1909 = vrot.slane %v1816, %v1908
        %v1912 = vlaneseq
        %v1913 = vshrl.u32 %v1912, 7
        %v1914 = vsub.s32 0, %v1913
        %v1915 = vrot.slane %v1831, %v1914
        %v1916 = vlaneseq
        %v1917 = vshrl.u32 %v1916, 7
        %v1918 = vsub.s32 0, %v1917
        %v1919 = vrot.slane %v1838, %v1918
        %v1922 = vlaneseq
        %v1923 = vshrl.u32 %v1922, 7
        %v1924 = vsub.s32 0, %v1923
        %v1925 = vrot.slane %v1854, %v1924
        %v1926 = vlaneseq
        %v1927 = vshrl.u32 %v1926, 7
        %v1928 = vsub.s32 0, %v1927
        %v1929 = vrot.slane %v1861, %v1928
        %v1932 = vsel %vm1661, %v1697, %v1865
        %v1933 = vsel %vm1661, %v1704, %v1869
        %v1934 = vsel %vm1664, %v1932, %v1875
        %v1935 = vsel %vm1664, %v1933, %v1879
        %v1936 = vsel %vm1667, %v1934, %v1885
        %v1937 = vsel %vm1667, %v1935, %v1889
        %v1938 = vsel %vm531, %v1936, %v1895
        %v1939 = vsel %vm531, %v1937, %v1899
        %v1940 = vsel %vm1672, %v1938, %v1905
        %v1941 = vsel %vm1672, %v1939, %v1909
        %v1942 = vsel %vm1675, %v1940, %v1915
        %v1943 = vsel %vm1675, %v1941, %v1919
        %v1944 = vsel %vm1678, %v1942, %v1925
        %v1945 = vsel %vm1678, %v1943, %v1929
        %v1946 = vld [vmem:[%s7] sm:$0xff]
        %v1947 = vld [vmem:[%s7 + $0x8] sm:$0xff]
        %v1948 = vld [vmem:[%s7 + $0x10] sm:$0xff]
        %v1949 = vld [vmem:[%s7 + $0x18] sm:$0xff]
        %v1950 = vld [vmem:[%s8] sm:$0x1]
        %v1952 = vlaneseq
        %v1953 = vshrl.u32 %v1952, 7
        %v1954 = vsub.s32 0, %v1953
        %v1955 = vrot.slane %v1950, %v1954
        %v1958 = vsel %vm617, %v1944, 0
        %v1961 = vsel %vm617, %v1945, 0
        %1963 = vmatprep.subr.mxu0 0.0
        %1964 = vmatpush1.msra.mxu0 %v1946
        %1965 = vmatprep.subr.mxu0 0.0
        %1966 = vmatpush1.msra.mxu0 %v1947
        %1967 = vmatprep.subr.mxu0 0.0
        %1968 = vmatpush1.msra.mxu0 %v1948
        %1969 = vmatprep.subr.mxu0 0.0
        %1970 = vmatpush1.msra.mxu0 %v1949
        %1971 = vmatprep.subr.mxu0 0.0
        %1972 = vmatpush1.msra.mxu0 0.0
        %1973 = vmatprep.subr.mxu0 0.0
        %1974 = vmatpush1.msra.mxu0 0.0
        %1975 = vmatprep.subr.mxu0 0.0
        %1976 = vmatpush1.msra.mxu0 0.0
        %1977 = vmatprep.subr.mxu0 0.0
        %1978 = vmatpush1.msra.mxu0 0.0
        %1979 = vmatprep.subr.mxu0 0.0
        %1980 = vmatpush1.msra.mxu0 0.0
        %1981 = vmatprep.subr.mxu0 0.0
        %1982 = vmatpush1.msra.mxu0 0.0
        %1983 = vmatprep.subr.mxu0 0.0
        %1984 = vmatpush1.msra.mxu0 0.0
        %1985 = vmatprep.subr.mxu0 0.0
        %1986 = vmatpush1.msra.mxu0 0.0
        %1987 = vmatprep.subr.mxu0 0.0
        %1988 = vmatpush1.msra.mxu0 0.0
        %1989 = vmatprep.subr.mxu0 0.0
        %1990 = vmatpush1.msra.mxu0 0.0
        %1991 = vmatprep.subr.mxu0 0.0
        %1992 = vmatpush1.msra.mxu0 0.0
        %1993 = vmatprep.subr.mxu0 0.0
        %1994 = vmatpush1.msra.mxu0 0.0
        %1995 = vmatprep.subr.mxu0 0.0
        %1996 = vmatpush1.msra.mxu0 0.0
        %1997 = vmatprep.subr.mxu0 0.0
        %1998 = vmatpush1.msra.mxu0 0.0
        %1999 = vmatprep.subr.mxu0 0.0
        %2000 = vmatpush1.msra.mxu0 0.0
        %2001 = vmatprep.subr.mxu0 0.0
        %2002 = vmatpush1.msra.mxu0 0.0
        %2003 = vmatprep.subr.mxu0 0.0
        %2004 = vmatpush1.msra.mxu0 0.0
        %2005 = vmatprep.subr.mxu0 0.0
        %2006 = vmatpush1.msra.mxu0 0.0
        %2007 = vmatprep.subr.mxu0 0.0
        %2008 = vmatpush1.msra.mxu0 0.0
        %2009 = vmatprep.subr.mxu0 0.0
        %2010 = vmatpush1.msra.mxu0 0.0
        %2011 = vmatprep.subr.mxu0 0.0
        %2012 = vmatpush1.msra.mxu0 0.0
        %2013 = vmatprep.subr.mxu0 0.0
        %2014 = vmatpush1.msra.mxu0 0.0
        %2015 = vmatprep.subr.mxu0 0.0
        %2016 = vmatpush1.msra.mxu0 0.0
        %2017 = vmatprep.subr.mxu0 0.0
        %2018 = vmatpush1.msra.mxu0 0.0
        %2019 = vmatprep.subr.mxu0 0.0
        %2020 = vmatpush1.msra.mxu0 0.0
        %2021 = vmatprep.subr.mxu0 0.0
        %2022 = vmatpush1.msra.mxu0 0.0
        %2023 = vmatprep.subr.mxu0 0.0
        %2024 = vmatpush1.msra.mxu0 0.0
        %2025 = vmatprep.subr.mxu0 0.0
        %2026 = vmatpush1.msra.mxu0 0.0
        %2027 = vmatprep.mubr.f32.mxu0 0.0
        %2028 = vmatmul.mubr.f32.gmra.mrb[0].mxu0 %v1958
        %v2029 = vpop.f32.mrb[0].mxu0
        %v2030 = vadd.f32 %v1955, %v2029
        %v2031 = vpop.f32.mrb[0].mxu0
        %2032 = vmatprep.mubr.f32.mxu0 0.0
        %2033 = vmatmul.mubr.f32.gmra.mrb[0].mxu0 %v1961
        %v2034 = vpop.f32.mrb[0].mxu0
        %v2035 = vadd.f32 %v1955, %v2034
        %v2036 = vpop.f32.mrb[0].mxu0
        %2037 = vdwg.mxu0
        %vm2038 = vcmask 23552
        %2039 = vst.msk [vmem:[%s481] sm:$0xff] %vm2038, %v2030
        %2040 = vst.msk [vmem:[%s481 + $0x8] sm:$0xff] %vm2038, %v2035
        %s2041 = sand.u32 %s257, 1
        %s2042 = sand.u32 %s257, 1
        %s2043 = smul.addr %s2042, 16
        %s2044 = scalar_lea.vmem [#allocation4], %s2043
        %s2045 = sand.u32 %s311, 1
        %s2046 = scalar_lea.sflag [#allocation8], %s2045
        %s2047 = sand.u32 %s311, 1
        %s2048 = smul.addr %s2047, 16
        %s2049 = scalar_lea.vmem [#allocation7], %s2048
        // Predicated region
        $region99: #{tpu_custom_call.1} parent=89 // pred_check
          %p2050 = pneg %p267
        $region100: #{tpu_custom_call.1} parent=89 // pred_check_branch
          %2052 = sbr.rel (%p2050) target = $region102
        $region101: #{tpu_custom_call.1} parent=89 // pred_region
          %s2053 = smul.u32 2, %s31
          %s2054 = smul.addr %s2053, 2
          %s2055 = sadd.s32 %s32, %s2054
          %s2056 = smul.addr %s2055, 8
          %s2057 = scalar_lea.vmem %s9, %s2056
          // Predicated region
          $region103: #{tpu_custom_call.1} parent=101 // pred_check
            _
          $region104: #{tpu_custom_call.1} parent=101 // pred_check_branch
            %2059 = sbr.rel (0) target = $region106
          $region105: #{tpu_custom_call.1} parent=101 // pred_region
            // Predicated region
            $region107: #{tpu_custom_call.1} parent=105 // pred_check
              _
            $region108: #{tpu_custom_call.1} parent=105 // pred_check_branch
              %2061 = sbr.rel (0) target = $region110
            $region109: #{tpu_custom_call.1} parent=105 // pred_region
              // Predicated region
              $region122: #{tpu_custom_call.1} parent=109 // pred_check
                _
              $region123: #{tpu_custom_call.1} parent=109 // pred_check_branch
                %2078 = sbr.rel (0) target = $region125
              $region124: #{tpu_custom_call.1} parent=109 // pred_region
                loop: start=0, step=1, limit=1
                $region126: #{tpu_custom_call.1} parent=124 // loop_pre_header
                  _
                $region127: #{tpu_custom_call.1} parent=124 // loop_header
                  %s2080 = sphi 0, %s2084
                  %p2081 = scmp.ge.s32.totalorder %s2080, 1
                  %s2085 = sphi %s2044, %s2044
                  %s2086 = sphi %s2057, %s2057
                $region128: #{tpu_custom_call.1} parent=124 // loop_header_branch
                  %2083 = sbr.rel (%p2081) target = $region132
                $region129: #{tpu_custom_call.1} parent=124 // loop_body
                  %v2087 = vld [vmem:[%s2085] sm:$0xff]
                  %2088 = vst [vmem:[%s2086] sm:$0xff] %v2087
                  %v2089 = vld [vmem:[%s2085 + $0x8] sm:$0xff]
                  %2090 = vst [vmem:[%s2086 + $0x10] sm:$0xff] %v2089
                $region130: #{tpu_custom_call.1} parent=124 // loop_footer
                  %s2084 = sadd.s32 1, %s2080
                $region131: #{tpu_custom_call.1} parent=124 // loop_footer_branch
                  %2079 = sbr.rel target = $region127
                $region132: #{tpu_custom_call.1} parent=124 // loop_exit
                  _
              $region125: #{tpu_custom_call.1} parent=109 // pred_fallthru
                _
              // Predicated region
              $region133: #{tpu_custom_call.1} parent=109 // pred_check
                _
              $region134: #{tpu_custom_call.1} parent=109 // pred_check_branch
                %2092 = sbr.rel target = $region136
              $region135: #{tpu_custom_call.1} parent=109 // pred_region
                _
              $region136: #{tpu_custom_call.1} parent=109 // pred_fallthru
                _
            $region110: #{tpu_custom_call.1} parent=105 // pred_fallthru
              _
            // Predicated region
            $region111: #{tpu_custom_call.1} parent=105 // pred_check
              _
            $region112: #{tpu_custom_call.1} parent=105 // pred_check_branch
              %2063 = sbr.rel target = $region114
            $region113: #{tpu_custom_call.1} parent=105 // pred_region
              loop: start=0, step=1, limit=1
              $region115: #{tpu_custom_call.1} parent=113 // loop_pre_header
                _
              $region116: #{tpu_custom_call.1} parent=113 // loop_header
                %s2066 = sphi 0, %s2070
                %p2067 = scmp.ge.s32.totalorder %s2066, 1
                %s2071 = sphi %s2044, %s2044
                %s2072 = sphi %s2057, %s2057
              $region117: #{tpu_custom_call.1} parent=113 // loop_header_branch
                %2069 = sbr.rel (%p2067) target = $region121
              $region118: #{tpu_custom_call.1} parent=113 // loop_body
                %v2073 = vld [vmem:[%s2071] sm:$0xff]
                %2074 = vst [vmem:[%s2072] sm:$0xff] %v2073
                %v2075 = vld [vmem:[%s2071 + $0x8] sm:$0xff]
                %2076 = vst [vmem:[%s2072 + $0x10] sm:$0xff] %v2075
              $region119: #{tpu_custom_call.1} parent=113 // loop_footer
                %s2070 = sadd.s32 1, %s2066
              $region120: #{tpu_custom_call.1} parent=113 // loop_footer_branch
                %2065 = sbr.rel target = $region116
              $region121: #{tpu_custom_call.1} parent=113 // loop_exit
                _
            $region114: #{tpu_custom_call.1} parent=105 // pred_fallthru
              _
          $region106: #{tpu_custom_call.1} parent=101 // pred_fallthru
            _
          %2093 = vnop
        $region102: #{tpu_custom_call.1} parent=89 // pred_fallthru
          _
        // Predicated region
        $region137: #{tpu_custom_call.1} parent=89 // pred_check
          %p2094 = pneg %p293
        $region138: #{tpu_custom_call.1} parent=89 // pred_check_branch
          %2096 = sbr.rel (%p2094) target = $region140
        $region139: #{tpu_custom_call.1} parent=89 // pred_region
          %s2098 = ssub.s32 32, 32
          %2099 = vsyncadd [#allocation6], %s2098
          %s2100 = smul.addr %s31, 32
          %s2101 = scalar_lea.hbm %s10, %s2100
          %s2103 = sshll.u32 [#allocation5], 4
          %s2104 = int_to_ptr.vmem [resolvable:$true] %s2103
          %2106 = dma.vmem_to_hbm [thread:$0]  %s2104, 32, %s2101, [#allocation6]
        $region140: #{tpu_custom_call.1} parent=89 // pred_fallthru
          _
        // Predicated region
        $region141: #{tpu_custom_call.1} parent=89 // pred_check
          %p2107 = pneg %p321
        $region142: #{tpu_custom_call.1} parent=89 // pred_check_branch
          %2109 = sbr.rel (%p2107) target = $region144
        $region143: #{tpu_custom_call.1} parent=89 // pred_region
          %s2110 = smul.u32 2, %s31
          %s2112 = ssub.s32 256, 256
          %2113 = vsyncadd %s2046, %s2112
          %s2114 = smul.addr %s2110, 2
          %s2115 = sadd.s32 %s32, %s2114
          %s2116 = smul.addr %s2115, 128
          %s2117 = scalar_lea.hbm %s11, %s2116
          %s2118 = sshll.u32 %s2049, 4
          %s2119 = int_to_ptr.vmem [resolvable:$true] %s2118
          %2124 = dma.vmem_to_hbm [thread:$0]  %s2119, 256, %s2117, %s2046, 128, 256, 8
        $region144: #{tpu_custom_call.1} parent=89 // pred_fallthru
          _
        // Predicated region
        $region145: #{tpu_custom_call.1} parent=89 // pred_check
          %p2125 = pneg %p293
        $region146: #{tpu_custom_call.1} parent=89 // pred_check_branch
          %2127 = sbr.rel (%p2125) target = $region148
        $region147: #{tpu_custom_call.1} parent=89 // pred_region
          %2128 = dma.done [#allocation6], 32
        $region148: #{tpu_custom_call.1} parent=89 // pred_fallthru
          _
      $region90: #{tpu_custom_call.1} parent=5 // pred_fallthru
        _
      %p2129 = scmp.le.s32.totalorder 2, %s22
      // Predicated region
      $region149: #{tpu_custom_call.1} parent=5 // pred_check
        %p2130 = pneg %p2129
      $region150: #{tpu_custom_call.1} parent=5 // pred_check_branch
        %2132 = sbr.rel (%p2130) target = $region152
      $region151: #{tpu_custom_call.1} parent=5 // pred_region
        %s2133 = ssub.s32 %s22, 2
        // Predicated region
        $region153: #{tpu_custom_call.1} parent=151 // pred_check
          %p2134 = pneg %p273
        $region154: #{tpu_custom_call.1} parent=151 // pred_check_branch
          %2136 = sbr.rel (%p2134) target = $region156
        $region155: #{tpu_custom_call.1} parent=151 // pred_region
          %s2137 = sand.u32 %s258, 1
          %s2138 = sand.u32 %s258, 1
          %s2139 = smul.addr %s2138, 16
          %s2140 = scalar_lea.vmem [#allocation4], %s2139
        $region156: #{tpu_custom_call.1} parent=151 // pred_fallthru
          _
        // Predicated region
        $region157: #{tpu_custom_call.1} parent=151 // pred_check
          %p2141 = pneg %p327
        $region158: #{tpu_custom_call.1} parent=151 // pred_check_branch
          %2143 = sbr.rel (%p2141) target = $region160
        $region159: #{tpu_custom_call.1} parent=151 // pred_region
          %s2144 = sand.u32 %s312, 1
          %s2145 = scalar_lea.sflag [#allocation8], %s2144
          %s2146 = sand.u32 %s312, 1
          %s2147 = smul.addr %s2146, 16
          %s2148 = scalar_lea.vmem [#allocation7], %s2147
          %2149 = dma.done %s2145, 256
        $region160: #{tpu_custom_call.1} parent=151 // pred_fallthru
          _
      $region152: #{tpu_custom_call.1} parent=5 // pred_fallthru
        _
    $region6: #{tpu_custom_call.1} parent=1 // loop_footer
      %s26 = sadd.s32 1, %s22
    $region7: #{tpu_custom_call.1} parent=1 // loop_footer_branch
      %21 = sbr.rel target = $region3
    $region8: #{tpu_custom_call.1} parent=1 // loop_exit
      _
    %2150 = vsyncpa [#allocation6], 1
    %s2151 = scalar_lea.sflag [#allocation6], 1
    %2152 = vsyncpa %s2151, 1
    %2153 = vsyncpa [#allocation8], 1
    %s2154 = scalar_lea.sflag [#allocation8], 1
    %2155 = vsyncpa %s2154, 1

</llo_original>
